<compile_context>
chip_gen: v6e
topology: v6e:2x2x1
jax: 0.10.0
libtpu: 0.0.40
codegen_flags: <defaults>
</compile_context>

<pallas_src>
import functools

import jax
import jax.numpy as jnp
from jax.experimental import pallas as pl
from jax.experimental.pallas import tpu as pltpu

EPS = 1e-5   # PyTorch BatchNorm2d default
LANE = 128


def _round_up(x, m):
    return (x + m - 1) // m * m


# ---------------------------------------------------------------------------
# Kernel 1: fold training-mode batch statistics into per-channel scale/shift.
# Tiled over row blocks of the flattened (rows, C_pad) slab; sum/sumsq are
# accumulated in VMEM scratch and finalized on the last grid step.
# ---------------------------------------------------------------------------
def _bn_stats_kernel(x_ref, gamma_ref, beta_ref, scale_ref, shift_ref,
                     sum_ref, sq_ref, *, count):
    i = pl.program_id(0)

    @pl.when(i == 0)
    def _():
        sum_ref[...] = jnp.zeros_like(sum_ref)
        sq_ref[...] = jnp.zeros_like(sq_ref)

    x = x_ref[...]                                  # (row_tile, C) f32
    sum_ref[...] += jnp.sum(x, axis=0, keepdims=True)
    sq_ref[...] += jnp.sum(x * x, axis=0, keepdims=True)

    @pl.when(i == pl.num_programs(0) - 1)
    def _():
        inv_n = 1.0 / count
        mean = sum_ref[...] * inv_n
        var = sq_ref[...] * inv_n - mean * mean     # biased var (training mode)
        inv = jax.lax.rsqrt(var + EPS)
        scale = gamma_ref[...] * inv
        scale_ref[...] = scale
        shift_ref[...] = beta_ref[...] - mean * scale


def _bn_scale_shift(slab, gamma_p, beta_p):
    """slab: (N,H,W,C_pad) f32 -> per-channel (scale, shift), each (1, C_pad)."""
    n, h, w, c = slab.shape
    rows = n * h * w
    x2 = slab.reshape(rows, c)
    row_tile = min(1024, _round_up(rows, 8))
    rows_pad = _round_up(rows, row_tile)
    if rows_pad != rows:
        # zero rows do not perturb sum / sum-of-squares; divide by true count.
        x2 = jnp.pad(x2, ((0, rows_pad - rows), (0, 0)))

    kernel = functools.partial(_bn_stats_kernel, count=float(rows))
    return pl.pallas_call(
        kernel,
        out_shape=(jax.ShapeDtypeStruct((1, c), jnp.float32),
                   jax.ShapeDtypeStruct((1, c), jnp.float32)),
        grid=(rows_pad // row_tile,),
        in_specs=[
            pl.BlockSpec((row_tile, c), lambda i: (i, 0)),
            pl.BlockSpec((1, c), lambda i: (0, 0)),
            pl.BlockSpec((1, c), lambda i: (0, 0)),
        ],
        out_specs=(pl.BlockSpec((1, c), lambda i: (0, 0)),
                   pl.BlockSpec((1, c), lambda i: (0, 0))),
        scratch_shapes=[pltpu.VMEM((1, c), jnp.float32),
                        pltpu.VMEM((1, c), jnp.float32)],
        compiler_params=pltpu.CompilerParams(
            dimension_semantics=("arbitrary",)),
    )(x2, gamma_p, beta_p)


# ---------------------------------------------------------------------------
# Kernel 2: BN-apply + ReLU + 3x3 conv (im2col -> one MXU matmul) + slab write.
#   x_ref  : (B_t, H, W, C)   full lane-dense slab tile, f32
#   scale / shift / b : (1, C) f32     w_ref : (9*C, C) bf16 (HWIO flattened,
#       zero-padded rows for non-input channels, columns placed at the new
#       channel offset so the matmul directly produces the slab-aligned update)
#   o_ref  : (B_t, H, W, C)   new slab tile = old slab + conv update
# ---------------------------------------------------------------------------
def _bn_relu_conv_kernel(x_ref, scale_ref, shift_ref, w_ref, b_ref, o_ref):
    bt, h, w, c = x_ref.shape

    x = x_ref[...]                                          # f32
    scale = scale_ref[...].reshape(1, 1, 1, c)
    shift = shift_ref[...].reshape(1, 1, 1, c)
    xn = jnp.maximum(x * scale + shift, 0.0)                # BN + ReLU (f32)

    # padding=1: build the padded activation with zero-halo concats (no
    # redundant full-buffer zero fill, no persistent scratch).
    zrow = jnp.zeros((bt, 1, w, c), jnp.float32)
    xp = jnp.concatenate([zrow, xn, zrow], axis=1)          # (bt, h+2, w, c)
    zcol = jnp.zeros((bt, h + 2, 1, c), jnp.float32)
    xp = jnp.concatenate([zcol, xp, zcol], axis=2)          # (bt, h+2, w+2, c)

    # im2col: fold the 9 taps into the contraction dim -> one matmul.
    taps = [xp[:, ky:ky + h, kx:kx + w, :]
            for ky in range(3) for kx in range(3)]
    patches = jnp.concatenate(taps, axis=-1)                # (bt, h, w, 9c)
    patches = patches.reshape(bt * h * w, 9 * c).astype(jnp.bfloat16)

    y = jnp.dot(patches, w_ref[...],
                preferred_element_type=jnp.float32)         # (bt*h*w, c) f32
    y = y + b_ref[...]                                      # padded bias

    # Old channels: weight columns & bias are zero -> y == 0 -> pass-through.
    # New channels: their slab slice is zero -> out = conv + bias.
    o_ref[...] = x + y.reshape(bt, h, w, c)


def _pick_batch_tile(n, h, w, c, budget_bytes=8 << 20, max_rows=4096):
    """Largest divisor of n whose f32 tile fits the budget (>=512 rows if possible)."""
    best = 1
    for d in range(1, n + 1):
        if n % d:
            continue
        if d * h * w <= max_rows and d * h * w * c * 4 <= budget_bytes:
            best = d
    return best


def _bn_relu_conv_add(slab, scale, shift, w_mat, b_pad):
    n, h, w, c = slab.shape
    bt = _pick_batch_tile(n, h, w, c)

    # Re-derive the VMEM budget explicitly (v7x has 64 MiB physical).
    tile_bytes = bt * h * w * c * 4
    vmem_est = (4 * tile_bytes                       # in + out, double-buffered
                + 2 * w_mat.size * 2                 # bf16 weight, 2 buffers
                + bt * h * w * 9 * c * 4             # im2col patches (f32)
                + bt * (h + 2) * (w + 2) * c * 4     # padded activations
                + (4 << 20))
    vmem_limit = int(min(64 << 20, max(16 << 20, 2 * vmem_est)))

    cost = pl.CostEstimate(
        flops=int(2 * n * h * w * 9 * c * c),
        transcendentals=0,
        bytes_accessed=int(4 * 2 * n * h * w * c + 2 * w_mat.size),
    )

    return pl.pallas_call(
        _bn_relu_conv_kernel,
        out_shape=jax.ShapeDtypeStruct((n, h, w, c), jnp.float32),
        grid=(n // bt,),
        in_specs=[
            pl.BlockSpec((bt, h, w, c), lambda i: (i, 0, 0, 0)),
            pl.BlockSpec((1, c), lambda i: (0, 0)),
            pl.BlockSpec((1, c), lambda i: (0, 0)),
            pl.BlockSpec((9 * c, c), lambda i: (0, 0)),
            pl.BlockSpec((1, c), lambda i: (0, 0)),
        ],
        out_specs=pl.BlockSpec((bt, h, w, c), lambda i: (i, 0, 0, 0)),
        input_output_aliases={0: 0},                 # update the slab in place
        compiler_params=pltpu.CompilerParams(
            dimension_semantics=("parallel",),
            vmem_limit_bytes=vmem_limit),
        cost_estimate=cost,
    )(slab, scale, shift, w_mat, b_pad)


# ---------------------------------------------------------------------------
# DenseBlock.forward
# ---------------------------------------------------------------------------
@jax.jit
def dense_block_forward(x_nchw, params):
    n, c0, h, w = x_nchw.shape
    c_total = c0 + sum(p[3].shape[0] for p in params)
    c_pad = _round_up(max(c_total, LANE), LANE)      # lane-dense channel slab

    x = jnp.transpose(x_nchw, (0, 2, 3, 1)).astype(jnp.float32)   # NCHW->NHWC
    slab = jnp.zeros((n, h, w, c_pad), jnp.float32).at[..., :c0].set(x)

    c_in = c0
    for gamma, beta, wgt, bias in params:
        c_out = wgt.shape[0]

        # Wrapper-side layout plumbing / zero-padding (done once per layer).
        gamma_p = jnp.zeros((1, c_pad), jnp.float32)
        gamma_p = gamma_p.at[0, :c_in].set(gamma.astype(jnp.float32))
        beta_p = jnp.zeros((1, c_pad), jnp.float32)
        beta_p = beta_p.at[0, :c_in].set(beta.astype(jnp.float32))

        # OIHW -> HWIO, padded to (3,3,c_pad,c_pad) with output columns placed
        # at this layer's channel offset, then flattened to (9*c_pad, c_pad).
        w_hwio = jnp.transpose(wgt, (2, 3, 1, 0)).astype(jnp.float32)
        w_pad = jnp.zeros((3, 3, c_pad, c_pad), jnp.float32)
        w_pad = w_pad.at[:, :, :c_in, c_in:c_in + c_out].set(w_hwio)
        w_mat = w_pad.reshape(9 * c_pad, c_pad).astype(jnp.bfloat16)

        b_pad = jnp.zeros((1, c_pad), jnp.float32)
        b_pad = b_pad.at[0, c_in:c_in + c_out].set(bias.astype(jnp.float32))

        # TODO(synk): only the freshly produced channels need new statistics;
        # fusing their sum/sumsq into the producing kernel would save one HBM
        # read of the slab per layer (not done here).
        scale, shift = _bn_scale_shift(slab, gamma_p, beta_p)
        slab = _bn_relu_conv_add(slab, scale, shift, w_mat, b_pad)
        c_in += c_out

    out = slab[..., :c_total]
    return jnp.transpose(out, (0, 3, 1, 2))          # back to NCHW


# ---------------------------------------------------------------------------
# Pure-JAX reference (matches PyTorch training-mode forward).
# ---------------------------------------------------------------------------
def ref_dense_block(x, params, bf16_matmul=False):
    for gamma, beta, wgt, bias in params:
        mean = jnp.mean(x, axis=(0, 2, 3), keepdims=True)
        var = jnp.mean((x - mean) ** 2, axis=(0, 2, 3), keepdims=True)
        xn = (x - mean) * jax.lax.rsqrt(var + EPS)
        xn = xn * gamma.reshape(1, -1, 1, 1) + beta.reshape(1, -1, 1, 1)
        xr = jnp.maximum(xn, 0.0)
        if bf16_matmul:
            lhs, rhs = xr.astype(jnp.bfloat16), wgt.astype(jnp.bfloat16)
            prec = None
        else:
            lhs, rhs = xr, wgt
            prec = jax.lax.Precision.HIGHEST
        y = jax.lax.conv_general_dilated(
            lhs, rhs, window_strides=(1, 1), padding="SAME",
            dimension_numbers=("NCHW", "OIHW", "NCHW"),
            preferred_element_type=jnp.float32, precision=prec)
        y = y + bias.reshape(1, -1, 1, 1)
        x = jnp.concatenate([x, y.astype(x.dtype)], axis=1)
    return x


if __name__ == "__main__":
    # DenseBlock(num_convs=2, input_channels=3, num_channels=10) on a
    # (4, 3, 8, 8) input -> (4, 23, 8, 8), as in the d2l example.
    num_convs, input_channels, num_channels = 2, 3, 10
    N, H, W = 4, 8, 8

    key = jax.random.PRNGKey(0)
    key, kx = jax.random.split(key)
    x = jax.random.normal(kx, (N, input_channels, H, W), jnp.float32)

    params = []
    cin = input_channels
    for _ in range(num_convs):
        key, kw, kb, kg, kbt = jax.random.split(key, 5)
        bound = 1.0 / (cin * 9) ** 0.5    # PyTorch Conv2d default init scale
        wgt = jax.random.uniform(kw, (num_channels, cin, 3, 3), jnp.float32,
                                 minval=-bound, maxval=bound)
        bias = jax.random.uniform(kb, (num_channels,), jnp.float32,
                                  minval=-bound, maxval=bound)
        gamma = 1.0 + 0.1 * jax.random.normal(kg, (cin,), jnp.float32)
        beta = 0.1 * jax.random.normal(kbt, (cin,), jnp.float32)
        params.append((gamma, beta, wgt, bias))
        cin += num_channels

    out = jax.block_until_ready(dense_block_forward(x, params))
    assert out.shape == (N, input_channels + num_convs * num_channels, H, W)

    # Logic check against a reference that uses the same precision choice
    # (bf16 MXU operands, f32 accumulation), plus a sanity bound vs full f32.
    ref_bf16 = ref_dense_block(x, params, bf16_matmul=True)
    ref_f32 = ref_dense_block(x, params, bf16_matmul=False)
    err_logic = float(jnp.max(jnp.abs(out - ref_bf16)))
    err_f32 = float(jnp.max(jnp.abs(out - ref_f32)))
    assert err_logic < 2e-2, f"logic mismatch vs bf16 reference: {err_logic}"
    assert err_f32 < 0.25, f"deviation vs f32 reference too large: {err_f32}"

    # TODO(synk): BatchNorm running_mean/running_var buffer updates are a
    # training-time side effect and do not affect the forward output; not modeled.
    print("KERNEL_OK")
</pallas_src>

<mosaic_0001>
module attributes {stable_mosaic.version = 11 : i64} {
  func.func @_bn_stats_kernel(%arg0: i32, %arg1: memref<256x128xf32, #tpu.memory_space<vmem>>, %arg2: memref<1x128xf32, #tpu.memory_space<vmem>>, %arg3: memref<1x128xf32, #tpu.memory_space<vmem>>, %arg4: memref<1x128xf32, #tpu.memory_space<vmem>>, %arg5: memref<1x128xf32, #tpu.memory_space<vmem>>, %arg6: memref<1x128xf32, #tpu.memory_space<vmem>>, %arg7: memref<1x128xf32, #tpu.memory_space<vmem>>) attributes {dimension_semantics = [#tpu.dimension_semantics<arbitrary>], iteration_bounds = array<i64: 1>, scalar_prefetch = 0 : i64, scratch_operands = 2 : i64, tpu.core_type = #tpu.core_type<tc>, window_params = [{transform_indices = @transform_0, window_bounds = array<i64: 256, 128>}, {pipeline_mode = #tpu.pipeline_mode<synchronous>, transform_indices = @transform_1, window_bounds = array<i64: 1, 128>}, {pipeline_mode = #tpu.pipeline_mode<synchronous>, transform_indices = @transform_2, window_bounds = array<i64: 1, 128>}, {pipeline_mode = #tpu.pipeline_mode<synchronous>, transform_indices = @transform_3, window_bounds = array<i64: 1, 128>}, {pipeline_mode = #tpu.pipeline_mode<synchronous>, transform_indices = @transform_4, window_bounds = array<i64: 1, 128>}]} {
    %c0_i32 = arith.constant 0 : i32
    %0 = arith.cmpi eq, %arg0, %c0_i32 : i32
    %1 = arith.extui %0 : i1 to i32
    %c0_i32_0 = arith.constant 0 : i32
    %2 = arith.cmpi ne, %1, %c0_i32_0 : i32
    scf.if %2 {
      %cst_13 = arith.constant 0.000000e+00 : f32
      %18 = vector.broadcast %cst_13 : f32 to vector<1x128xf32>
      %c0_14 = arith.constant 0 : index
      %c0_15 = arith.constant 0 : index
      %19 = vector.load %arg6[%c0_14, %c0_15] : memref<1x128xf32, #tpu.memory_space<vmem>>, vector<1x128xf32>
      tpu.vector_store %arg6[%c0_14, %c0_15], %18 {strides = array<i32>} : memref<1x128xf32, #tpu.memory_space<vmem>>, vector<1x128xf32>,
      %cst_16 = arith.constant 0.000000e+00 : f32
      %20 = vector.broadcast %cst_16 : f32 to vector<1x128xf32>
      %c0_17 = arith.constant 0 : index
      %c0_18 = arith.constant 0 : index
      %21 = vector.load %arg7[%c0_17, %c0_18] : memref<1x128xf32, #tpu.memory_space<vmem>>, vector<1x128xf32>
      tpu.vector_store %arg7[%c0_17, %c0_18], %20 {strides = array<i32>} : memref<1x128xf32, #tpu.memory_space<vmem>>, vector<1x128xf32>,
    } else {
    }
    %c0 = arith.constant 0 : index
    %c0_1 = arith.constant 0 : index
    %3 = vector.load %arg1[%c0, %c0_1] : memref<256x128xf32, #tpu.memory_space<vmem>>, vector<256x128xf32>
    %c0_2 = arith.constant 0 : index
    %c0_3 = arith.constant 0 : index
    %4 = vector.load %arg6[%c0_2, %c0_3] : memref<1x128xf32, #tpu.memory_space<vmem>>, vector<1x128xf32>
    %cst = arith.constant dense<0.000000e+00> : vector<128xf32>
    %5 = vector.multi_reduction <add>, %3, %cst [0] : vector<256x128xf32> to vector<128xf32>
    %6 = vector.shape_cast %5 : vector<128xf32> to vector<1x128xf32>
    %7 = arith.addf %4, %6 : vector<1x128xf32>
    %c0_4 = arith.constant 0 : index
    %c0_5 = arith.constant 0 : index
    %8 = vector.load %arg6[%c0_4, %c0_5] : memref<1x128xf32, #tpu.memory_space<vmem>>, vector<1x128xf32>
    tpu.vector_store %arg6[%c0_4, %c0_5], %7 {strides = array<i32>} : memref<1x128xf32, #tpu.memory_space<vmem>>, vector<1x128xf32>,
    %c0_6 = arith.constant 0 : index
    %c0_7 = arith.constant 0 : index
    %9 = vector.load %arg7[%c0_6, %c0_7] : memref<1x128xf32, #tpu.memory_space<vmem>>, vector<1x128xf32>
    %10 = arith.mulf %3, %3 : vector<256x128xf32>
    %cst_8 = arith.constant dense<0.000000e+00> : vector<128xf32>
    %11 = vector.multi_reduction <add>, %10, %cst_8 [0] : vector<256x128xf32> to vector<128xf32>
    %12 = vector.shape_cast %11 : vector<128xf32> to vector<1x128xf32>
    %13 = arith.addf %9, %12 : vector<1x128xf32>
    %c0_9 = arith.constant 0 : index
    %c0_10 = arith.constant 0 : index
    %14 = vector.load %arg7[%c0_9, %c0_10] : memref<1x128xf32, #tpu.memory_space<vmem>>, vector<1x128xf32>
    tpu.vector_store %arg7[%c0_9, %c0_10], %13 {strides = array<i32>} : memref<1x128xf32, #tpu.memory_space<vmem>>, vector<1x128xf32>,
    %c0_i32_11 = arith.constant 0 : i32
    %15 = arith.cmpi eq, %arg0, %c0_i32_11 : i32
    %16 = arith.extui %15 : i1 to i32
    %c0_i32_12 = arith.constant 0 : i32
    %17 = arith.cmpi ne, %16, %c0_i32_12 : i32
    scf.if %17 {
      %c0_13 = arith.constant 0 : index
      %c0_14 = arith.constant 0 : index
      %18 = vector.load %arg6[%c0_13, %c0_14] : memref<1x128xf32, #tpu.memory_space<vmem>>, vector<1x128xf32>
      %cst_15 = arith.constant 3.906250e-03 : f32
      %19 = vector.broadcast %cst_15 : f32 to vector<1x128xf32>
      %20 = arith.mulf %18, %19 : vector<1x128xf32>
      %c0_16 = arith.constant 0 : index
      %c0_17 = arith.constant 0 : index
      %21 = vector.load %arg7[%c0_16, %c0_17] : memref<1x128xf32, #tpu.memory_space<vmem>>, vector<1x128xf32>
      %cst_18 = arith.constant 3.906250e-03 : f32
      %22 = vector.broadcast %cst_18 : f32 to vector<1x128xf32>
      %23 = arith.mulf %21, %22 : vector<1x128xf32>
      %24 = arith.mulf %20, %20 : vector<1x128xf32>
      %25 = arith.subf %23, %24 : vector<1x128xf32>
      %cst_19 = arith.constant 9.99999974E-6 : f32
      %26 = vector.broadcast %cst_19 : f32 to vector<1x128xf32>
      %27 = arith.addf %25, %26 : vector<1x128xf32>
      %28 = math.rsqrt %27 : vector<1x128xf32>
      %c0_20 = arith.constant 0 : index
      %c0_21 = arith.constant 0 : index
      %29 = vector.load %arg2[%c0_20, %c0_21] : memref<1x128xf32, #tpu.memory_space<vmem>>, vector<1x128xf32>
      %30 = arith.mulf %29, %28 : vector<1x128xf32>
      %c0_22 = arith.constant 0 : index
      %c0_23 = arith.constant 0 : index
      %31 = vector.load %arg4[%c0_22, %c0_23] : memref<1x128xf32, #tpu.memory_space<vmem>>, vector<1x128xf32>
      tpu.vector_store %arg4[%c0_22, %c0_23], %30 {strides = array<i32>} : memref<1x128xf32, #tpu.memory_space<vmem>>, vector<1x128xf32>,
      %c0_24 = arith.constant 0 : index
      %c0_25 = arith.constant 0 : index
      %32 = vector.load %arg3[%c0_24, %c0_25] : memref<1x128xf32, #tpu.memory_space<vmem>>, vector<1x128xf32>
      %33 = arith.mulf %20, %30 : vector<1x128xf32>
      %34 = arith.subf %32, %33 : vector<1x128xf32>
      %c0_26 = arith.constant 0 : index
      %c0_27 = arith.constant 0 : index
      %35 = vector.load %arg5[%c0_26, %c0_27] : memref<1x128xf32, #tpu.memory_space<vmem>>, vector<1x128xf32>
      tpu.vector_store %arg5[%c0_26, %c0_27], %34 {strides = array<i32>} : memref<1x128xf32, #tpu.memory_space<vmem>>, vector<1x128xf32>,
    } else {
    }
    return
  }
  func.func @transform_0(%arg0: i32) -> (i32, i32) {
    %c0_i32 = arith.constant 0 : i32
    %c0_i32_0 = arith.constant 0 : i32
    return %arg0, %c0_i32 : i32, i32
  }
  func.func @transform_1(%arg0: i32) -> (i32, i32) {
    %c0_i32 = arith.constant 0 : i32
    %c0_i32_0 = arith.constant 0 : i32
    %c0_i32_1 = arith.constant 0 : i32
    return %c0_i32, %c0_i32_0 : i32, i32
  }
  func.func @transform_2(%arg0: i32) -> (i32, i32) {
    %c0_i32 = arith.constant 0 : i32
    %c0_i32_0 = arith.constant 0 : i32
    %c0_i32_1 = arith.constant 0 : i32
    return %c0_i32, %c0_i32_0 : i32, i32
  }
  func.func @transform_3(%arg0: i32) -> (i32, i32) {
    %c0_i32 = arith.constant 0 : i32
    %c0_i32_0 = arith.constant 0 : i32
    %c0_i32_1 = arith.constant 0 : i32
    return %c0_i32, %c0_i32_0 : i32, i32
  }
  func.func @transform_4(%arg0: i32) -> (i32, i32) {
    %c0_i32 = arith.constant 0 : i32
    %c0_i32_0 = arith.constant 0 : i32
    %c0_i32_1 = arith.constant 0 : i32
    return %c0_i32, %c0_i32_0 : i32, i32
  }
}

module attributes {stable_mosaic.version = 11 : i64} {
  func.func @_bn_relu_conv_kernel(%arg0: i32, %arg1: memref<4x8x8x128xf32, #tpu.memory_space<vmem>>, %arg2: memref<1x128xf32, #tpu.memory_space<vmem>>, %arg3: memref<1x128xf32, #tpu.memory_space<vmem>>, %arg4: memref<1152x128xbf16, #tpu.memory_space<vmem>>, %arg5: memref<1x128xf32, #tpu.memory_space<vmem>>, %arg6: memref<4x8x8x128xf32, #tpu.memory_space<vmem>>) attributes {dimension_semantics = [#tpu.dimension_semantics<parallel>], iteration_bounds = array<i64: 1>, scalar_prefetch = 0 : i64, scratch_operands = 0 : i64, tpu.core_type = #tpu.core_type<tc>, window_params = [{transform_indices = @transform_0, window_bounds = array<i64: 4, 8, 8, 128>}, {pipeline_mode = #tpu.pipeline_mode<synchronous>, transform_indices = @transform_1, window_bounds = array<i64: 1, 128>}, {pipeline_mode = #tpu.pipeline_mode<synchronous>, transform_indices = @transform_2, window_bounds = array<i64: 1, 128>}, {pipeline_mode = #tpu.pipeline_mode<synchronous>, transform_indices = @transform_3, window_bounds = array<i64: 1152, 128>}, {pipeline_mode = #tpu.pipeline_mode<synchronous>, transform_indices = @transform_4, window_bounds = array<i64: 1, 128>}, {transform_indices = @transform_5, window_bounds = array<i64: 4, 8, 8, 128>}]} {
    %c0 = arith.constant 0 : index
    %c0_0 = arith.constant 0 : index
    %c0_1 = arith.constant 0 : index
    %c0_2 = arith.constant 0 : index
    %0 = vector.load %arg1[%c0, %c0_0, %c0_1, %c0_2] : memref<4x8x8x128xf32, #tpu.memory_space<vmem>>, vector<4x8x8x128xf32>
    %c0_3 = arith.constant 0 : index
    %c0_4 = arith.constant 0 : index
    %1 = vector.load %arg2[%c0_3, %c0_4] : memref<1x128xf32, #tpu.memory_space<vmem>>, vector<1x128xf32>
    %2 = vector.shape_cast %1 : vector<1x128xf32> to vector<1x1x1x128xf32>
    %c0_5 = arith.constant 0 : index
    %c0_6 = arith.constant 0 : index
    %3 = vector.load %arg3[%c0_5, %c0_6] : memref<1x128xf32, #tpu.memory_space<vmem>>, vector<1x128xf32>
    %4 = vector.shape_cast %3 : vector<1x128xf32> to vector<1x1x1x128xf32>
    %5 = vector.broadcast %2 : vector<1x1x1x128xf32> to vector<4x8x8x128xf32>
    %6 = arith.mulf %0, %5 : vector<4x8x8x128xf32>
    %7 = vector.broadcast %4 : vector<1x1x1x128xf32> to vector<4x8x8x128xf32>
    %8 = arith.addf %6, %7 : vector<4x8x8x128xf32>
    %cst = arith.constant 0.000000e+00 : f32
    %9 = vector.broadcast %cst : f32 to vector<4x8x8x128xf32>
    %10 = arith.maximumf %8, %9 : vector<4x8x8x128xf32>
    %cst_7 = arith.constant 0.000000e+00 : f32
    %11 = vector.broadcast %cst_7 : f32 to vector<4x1x8x128xf32>
    %12 = tpu.concatenate %11, %10, %11 in 1 : vector<4x1x8x128xf32>, vector<4x8x8x128xf32>, vector<4x1x8x128xf32> -> vector<4x10x8x128xf32>
    %cst_8 = arith.constant 0.000000e+00 : f32
    %13 = vector.broadcast %cst_8 : f32 to vector<4x10x1x128xf32>
    %14 = tpu.concatenate %13, %12, %13 in 2 : vector<4x10x1x128xf32>, vector<4x10x8x128xf32>, vector<4x10x1x128xf32> -> vector<4x10x10x128xf32>
    %15 = vector.extract_strided_slice %14 {offsets = [0, 0, 0, 0], sizes = [4, 8, 8, 128], strides = [1, 1, 1, 1]} : vector<4x10x10x128xf32> to vector<4x8x8x128xf32>
    %16 = vector.extract_strided_slice %14 {offsets = [0, 0, 1, 0], sizes = [4, 8, 8, 128], strides = [1, 1, 1, 1]} : vector<4x10x10x128xf32> to vector<4x8x8x128xf32>
    %17 = vector.extract_strided_slice %14 {offsets = [0, 0, 2, 0], sizes = [4, 8, 8, 128], strides = [1, 1, 1, 1]} : vector<4x10x10x128xf32> to vector<4x8x8x128xf32>
    %18 = vector.extract_strided_slice %14 {offsets = [0, 1, 0, 0], sizes = [4, 8, 8, 128], strides = [1, 1, 1, 1]} : vector<4x10x10x128xf32> to vector<4x8x8x128xf32>
    %19 = vector.extract_strided_slice %14 {offsets = [0, 1, 1, 0], sizes = [4, 8, 8, 128], strides = [1, 1, 1, 1]} : vector<4x10x10x128xf32> to vector<4x8x8x128xf32>
    %20 = vector.extract_strided_slice %14 {offsets = [0, 1, 2, 0], sizes = [4, 8, 8, 128], strides = [1, 1, 1, 1]} : vector<4x10x10x128xf32> to vector<4x8x8x128xf32>
    %21 = vector.extract_strided_slice %14 {offsets = [0, 2, 0, 0], sizes = [4, 8, 8, 128], strides = [1, 1, 1, 1]} : vector<4x10x10x128xf32> to vector<4x8x8x128xf32>
    %22 = vector.extract_strided_slice %14 {offsets = [0, 2, 1, 0], sizes = [4, 8, 8, 128], strides = [1, 1, 1, 1]} : vector<4x10x10x128xf32> to vector<4x8x8x128xf32>
    %23 = vector.extract_strided_slice %14 {offsets = [0, 2, 2, 0], sizes = [4, 8, 8, 128], strides = [1, 1, 1, 1]} : vector<4x10x10x128xf32> to vector<4x8x8x128xf32>
    %24 = tpu.concatenate %15, %16, %17, %18, %19, %20, %21, %22, %23 in 3 : vector<4x8x8x128xf32>, vector<4x8x8x128xf32>, vector<4x8x8x128xf32>, vector<4x8x8x128xf32>, vector<4x8x8x128xf32>, vector<4x8x8x128xf32>, vector<4x8x8x128xf32>, vector<4x8x8x128xf32>, vector<4x8x8x128xf32> -> vector<4x8x8x1152xf32>
    %25 = vector.shape_cast %24 : vector<4x8x8x1152xf32> to vector<256x1152xf32>
    %26 = arith.truncf %25 : vector<256x1152xf32> to vector<256x1152xbf16>
    %c0_9 = arith.constant 0 : index
    %c0_10 = arith.constant 0 : index
    %27 = vector.load %arg4[%c0_9, %c0_10] : memref<1152x128xbf16, #tpu.memory_space<vmem>>, vector<1152x128xbf16>
    %cst_11 = arith.constant dense<0.000000e+00> : vector<256x128xf32>
    %28 = tpu.matmul %26, %27, %cst_11 {dimension_numbers = #tpu.dot_dimension_numbers<[1], [0], [0], [1], [0, 0, 1, 1], [], []>} : vector<256x1152xbf16>, vector<1152x128xbf16>, vector<256x128xf32> -> vector<256x128xf32>
    %c0_12 = arith.constant 0 : index
    %c0_13 = arith.constant 0 : index
    %29 = vector.load %arg5[%c0_12, %c0_13] : memref<1x128xf32, #tpu.memory_space<vmem>>, vector<1x128xf32>
    %30 = vector.broadcast %29 : vector<1x128xf32> to vector<256x128xf32>
    %31 = arith.addf %28, %30 : vector<256x128xf32>
    %32 = vector.shape_cast %31 : vector<256x128xf32> to vector<4x8x8x128xf32>
    %33 = arith.addf %0, %32 : vector<4x8x8x128xf32>
    %c0_14 = arith.constant 0 : index
    %c0_15 = arith.constant 0 : index
    %c0_16 = arith.constant 0 : index
    %c0_17 = arith.constant 0 : index
    %34 = vector.load %arg6[%c0_14, %c0_15, %c0_16, %c0_17] : memref<4x8x8x128xf32, #tpu.memory_space<vmem>>, vector<4x8x8x128xf32>
    tpu.vector_store %arg6[%c0_14, %c0_15, %c0_16, %c0_17], %33 {strides = array<i32>} : memref<4x8x8x128xf32, #tpu.memory_space<vmem>>, vector<4x8x8x128xf32>,
    return
  }
  func.func @transform_0(%arg0: i32) -> (i32, i32, i32, i32) {
    %c0_i32 = arith.constant 0 : i32
    %c0_i32_0 = arith.constant 0 : i32
    %c0_i32_1 = arith.constant 0 : i32
    %c0_i32_2 = arith.constant 0 : i32
    return %arg0, %c0_i32, %c0_i32_0, %c0_i32_1 : i32, i32, i32, i32
  }
  func.func @transform_1(%arg0: i32) -> (i32, i32) {
    %c0_i32 = arith.constant 0 : i32
    %c0_i32_0 = arith.constant 0 : i32
    %c0_i32_1 = arith.constant 0 : i32
    return %c0_i32, %c0_i32_0 : i32, i32
  }
  func.func @transform_2(%arg0: i32) -> (i32, i32) {
    %c0_i32 = arith.constant 0 : i32
    %c0_i32_0 = arith.constant 0 : i32
    %c0_i32_1 = arith.constant 0 : i32
    return %c0_i32, %c0_i32_0 : i32, i32
  }
  func.func @transform_3(%arg0: i32) -> (i32, i32) {
    %c0_i32 = arith.constant 0 : i32
    %c0_i32_0 = arith.constant 0 : i32
    %c0_i32_1 = arith.constant 0 : i32
    return %c0_i32, %c0_i32_0 : i32, i32
  }
  func.func @transform_4(%arg0: i32) -> (i32, i32) {
    %c0_i32 = arith.constant 0 : i32
    %c0_i32_0 = arith.constant 0 : i32
    %c0_i32_1 = arith.constant 0 : i32
    return %c0_i32, %c0_i32_0 : i32, i32
  }
  func.func @transform_5(%arg0: i32) -> (i32, i32, i32, i32) {
    %c0_i32 = arith.constant 0 : i32
    %c0_i32_0 = arith.constant 0 : i32
    %c0_i32_1 = arith.constant 0 : i32
    %c0_i32_2 = arith.constant 0 : i32
    return %arg0, %c0_i32, %c0_i32_0, %c0_i32_1 : i32, i32, i32, i32
  }
}

</mosaic_0001>

<llo_original>
// kernel: dense_block_forward.4
$region0: #{dense_block_forward.4}
  #allocation0 [shape = 'u32[]', space=smem, size = 0x4, offset = 0x4, fixed_abs, tag = 'smem constant byte address 0x4 - core index']
  #allocation1 [shape = 'u32[144,128]{1,0:T(1,128)}', space=vmem, size = 0x12000, scoped, tag = 'internal scratch']
  #allocation2 [shape = 'f32[1,128]{1,0:T(1,128)}', space=vmem, size = 0x200, scoped, tag = 'scratch operand']
  #allocation3 [shape = 'f32[1,128]{1,0:T(1,128)}', space=vmem, size = 0x200, scoped, tag = 'scratch operand']
  %s0 = inlined_call_operand.vmem [shape: f32[256,128], index: 0, kind: input, shape index: {}]
  %s1 = inlined_call_operand.vmem [shape: f32[1,128], index: 1, kind: input, shape index: {}]
  %s2 = inlined_call_operand.vmem [shape: f32[1,128], index: 2, kind: input, shape index: {}]
  %s3 = inlined_call_operand.vmem [shape: f32[1,128], index: 3, kind: output, shape index: {0}]
  %s4 = inlined_call_operand.vmem [shape: f32[1,128], index: 4, kind: output, shape index: {1}]
  %5 = xla_tuple %s3, %s4
  %s6 = sld [smem:[#allocation0]]
  $region38: #{dense_block_forward.4} parent=0
    _
  %s8 = ssub.s32 1, %s6
  %s9 = scalar_select 0, %s8, %s6
  // Predicated region
  $region2: #{dense_block_forward.4} parent=0 // pred_check
    _
  $region3: #{dense_block_forward.4} parent=0 // pred_check_branch
    %11 = sbr.rel (0) target = $region5
  $region4: #{dense_block_forward.4} parent=0 // pred_region
    _
  $region5: #{dense_block_forward.4} parent=0 // pred_fallthru
    _
  // Predicated region
  $region6: #{dense_block_forward.4} parent=0 // pred_check
    _
  $region7: #{dense_block_forward.4} parent=0 // pred_check_branch
    %13 = sbr.rel (0) target = $region9
  $region8: #{dense_block_forward.4} parent=0 // pred_region
    _
  $region9: #{dense_block_forward.4} parent=0 // pred_fallthru
    _
  // Predicated region
  $region10: #{dense_block_forward.4} parent=0 // pred_check
    _
  $region11: #{dense_block_forward.4} parent=0 // pred_check_branch
    %15 = sbr.rel (0) target = $region13
  $region12: #{dense_block_forward.4} parent=0 // pred_region
    _
  $region13: #{dense_block_forward.4} parent=0 // pred_fallthru
    _
  %p16 = scmp.eq.s32.totalorder 0, 0
  // Predicated region
  $region14: #{dense_block_forward.4} parent=0 // pred_check
    %p17 = pneg %p16
  $region15: #{dense_block_forward.4} parent=0 // pred_check_branch
    %19 = sbr.rel (%p17) target = $region17
  $region16: #{dense_block_forward.4} parent=0 // pred_region
    %20 = vst [vmem:[#allocation2] sm:$0x1] 0.0
    %21 = vst [vmem:[#allocation3] sm:$0x1] 0.0
  $region17: #{dense_block_forward.4} parent=0 // pred_fallthru
    _
  %v22 = vld [vmem:[%s0] sm:$0xff]
  %v23 = vld [vmem:[%s0 + $0x8] sm:$0xff]
  %v24 = vld [vmem:[%s0 + $0x10] sm:$0xff]
  %v25 = vld [vmem:[%s0 + $0x18] sm:$0xff]
  %v26 = vld [vmem:[%s0 + $0x20] sm:$0xff]
  %v27 = vld [vmem:[%s0 + $0x28] sm:$0xff]
  %v28 = vld [vmem:[%s0 + $0x30] sm:$0xff]
  %v29 = vld [vmem:[%s0 + $0x38] sm:$0xff]
  %v30 = vld [vmem:[%s0 + $0x40] sm:$0xff]
  %v31 = vld [vmem:[%s0 + $0x48] sm:$0xff]
  %v32 = vld [vmem:[%s0 + $0x50] sm:$0xff]
  %v33 = vld [vmem:[%s0 + $0x58] sm:$0xff]
  %v34 = vld [vmem:[%s0 + $0x60] sm:$0xff]
  %v35 = vld [vmem:[%s0 + $0x68] sm:$0xff]
  %v36 = vld [vmem:[%s0 + $0x70] sm:$0xff]
  %v37 = vld [vmem:[%s0 + $0x78] sm:$0xff]
  %v38 = vld [vmem:[%s0 + $0x80] sm:$0xff]
  %v39 = vld [vmem:[%s0 + $0x88] sm:$0xff]
  %v40 = vld [vmem:[%s0 + $0x90] sm:$0xff]
  %v41 = vld [vmem:[%s0 + $0x98] sm:$0xff]
  %v42 = vld [vmem:[%s0 + $0xa0] sm:$0xff]
  %v43 = vld [vmem:[%s0 + $0xa8] sm:$0xff]
  %v44 = vld [vmem:[%s0 + $0xb0] sm:$0xff]
  %v45 = vld [vmem:[%s0 + $0xb8] sm:$0xff]
  %v46 = vld [vmem:[%s0 + $0xc0] sm:$0xff]
  %v47 = vld [vmem:[%s0 + $0xc8] sm:$0xff]
  %v48 = vld [vmem:[%s0 + $0xd0] sm:$0xff]
  %v49 = vld [vmem:[%s0 + $0xd8] sm:$0xff]
  %v50 = vld [vmem:[%s0 + $0xe0] sm:$0xff]
  %v51 = vld [vmem:[%s0 + $0xe8] sm:$0xff]
  %v52 = vld [vmem:[%s0 + $0xf0] sm:$0xff]
  %v53 = vld [vmem:[%s0 + $0xf8] sm:$0xff]
  %v54 = vld [vmem:[#allocation2] sm:$0x1]
  %v55 = vadd.f32 %v22, %v23
  %v56 = vadd.f32 %v55, %v24
  %v57 = vadd.f32 %v56, %v25
  %v58 = vadd.f32 %v57, %v26
  %v59 = vadd.f32 %v58, %v27
  %v60 = vadd.f32 %v59, %v28
  %v61 = vadd.f32 %v60, %v29
  %v62 = vadd.f32 %v61, %v30
  %v63 = vadd.f32 %v62, %v31
  %v64 = vadd.f32 %v63, %v32
  %v65 = vadd.f32 %v64, %v33
  %v66 = vadd.f32 %v65, %v34
  %v67 = vadd.f32 %v66, %v35
  %v68 = vadd.f32 %v67, %v36
  %v69 = vadd.f32 %v68, %v37
  %v70 = vadd.f32 %v69, %v38
  %v71 = vadd.f32 %v70, %v39
  %v72 = vadd.f32 %v71, %v40
  %v73 = vadd.f32 %v72, %v41
  %v74 = vadd.f32 %v73, %v42
  %v75 = vadd.f32 %v74, %v43
  %v76 = vadd.f32 %v75, %v44
  %v77 = vadd.f32 %v76, %v45
  %v78 = vadd.f32 %v77, %v46
  %v79 = vadd.f32 %v78, %v47
  %v80 = vadd.f32 %v79, %v48
  %v81 = vadd.f32 %v80, %v49
  %v82 = vadd.f32 %v81, %v50
  %v83 = vadd.f32 %v82, %v51
  %v84 = vadd.f32 %v83, %v52
  %v85 = vadd.f32 %v84, %v53
  %v86 = vrot.slane %v85, 4
  %v87 = vadd.f32 %v85, %v86
  %v88 = vrot.slane %v87, 2
  %v89 = vadd.f32 %v87, %v88
  %v90 = vrot.slane %v89, 1
  %v91 = vadd.f32 %v89, %v90
  %v92 = vadd.f32 %v54, %v91
  %93 = vst [vmem:[#allocation2] sm:$0x1] %v92
  %v94 = vld [vmem:[#allocation3] sm:$0x1]
  %v95 = vmul.f32 %v22, %v22
  %v96 = vmul.f32 %v23, %v23
  %v97 = vmul.f32 %v24, %v24
  %v98 = vmul.f32 %v25, %v25
  %v99 = vmul.f32 %v26, %v26
  %v100 = vmul.f32 %v27, %v27
  %v101 = vmul.f32 %v28, %v28
  %v102 = vmul.f32 %v29, %v29
  %v103 = vmul.f32 %v30, %v30
  %v104 = vmul.f32 %v31, %v31
  %v105 = vmul.f32 %v32, %v32
  %v106 = vmul.f32 %v33, %v33
  %v107 = vmul.f32 %v34, %v34
  %v108 = vmul.f32 %v35, %v35
  %v109 = vmul.f32 %v36, %v36
  %v110 = vmul.f32 %v37, %v37
  %v111 = vmul.f32 %v38, %v38
  %v112 = vmul.f32 %v39, %v39
  %v113 = vmul.f32 %v40, %v40
  %v114 = vmul.f32 %v41, %v41
  %v115 = vmul.f32 %v42, %v42
  %v116 = vmul.f32 %v43, %v43
  %v117 = vmul.f32 %v44, %v44
  %v118 = vmul.f32 %v45, %v45
  %v119 = vmul.f32 %v46, %v46
  %v120 = vmul.f32 %v47, %v47
  %v121 = vmul.f32 %v48, %v48
  %v122 = vmul.f32 %v49, %v49
  %v123 = vmul.f32 %v50, %v50
  %v124 = vmul.f32 %v51, %v51
  %v125 = vmul.f32 %v52, %v52
  %v126 = vmul.f32 %v53, %v53
  %v127 = vadd.f32 %v95, %v96
  %v128 = vadd.f32 %v127, %v97
  %v129 = vadd.f32 %v128, %v98
  %v130 = vadd.f32 %v129, %v99
  %v131 = vadd.f32 %v130, %v100
  %v132 = vadd.f32 %v131, %v101
  %v133 = vadd.f32 %v132, %v102
  %v134 = vadd.f32 %v133, %v103
  %v135 = vadd.f32 %v134, %v104
  %v136 = vadd.f32 %v135, %v105
  %v137 = vadd.f32 %v136, %v106
  %v138 = vadd.f32 %v137, %v107
  %v139 = vadd.f32 %v138, %v108
  %v140 = vadd.f32 %v139, %v109
  %v141 = vadd.f32 %v140, %v110
  %v142 = vadd.f32 %v141, %v111
  %v143 = vadd.f32 %v142, %v112
  %v144 = vadd.f32 %v143, %v113
  %v145 = vadd.f32 %v144, %v114
  %v146 = vadd.f32 %v145, %v115
  %v147 = vadd.f32 %v146, %v116
  %v148 = vadd.f32 %v147, %v117
  %v149 = vadd.f32 %v148, %v118
  %v150 = vadd.f32 %v149, %v119
  %v151 = vadd.f32 %v150, %v120
  %v152 = vadd.f32 %v151, %v121
  %v153 = vadd.f32 %v152, %v122
  %v154 = vadd.f32 %v153, %v123
  %v155 = vadd.f32 %v154, %v124
  %v156 = vadd.f32 %v155, %v125
  %v157 = vadd.f32 %v156, %v126
  %v158 = vrot.slane %v157, 4
  %v159 = vadd.f32 %v157, %v158
  %v160 = vrot.slane %v159, 2
  %v161 = vadd.f32 %v159, %v160
  %v162 = vrot.slane %v161, 1
  %v163 = vadd.f32 %v161, %v162
  %v164 = vadd.f32 %v94, %v163
  %165 = vst [vmem:[#allocation3] sm:$0x1] %v164
  // Predicated region
  $region18: #{dense_block_forward.4} parent=0 // pred_check
    %p166 = pneg %p16
  $region19: #{dense_block_forward.4} parent=0 // pred_check_branch
    %168 = sbr.rel (%p166) target = $region21
  $region20: #{dense_block_forward.4} parent=0 // pred_region
    %v169 = vld [vmem:[#allocation2] sm:$0x1]
    %v170 = vmul.f32 %v169, 0.00390625
    %v171 = vld [vmem:[#allocation3] sm:$0x1]
    %v172 = vmul.f32 %v171, 0.00390625
    %v173 = vmul.f32 %v170, %v170
    %v174 = vsub.f32 %v172, %v173
    %v175 = vadd.f32 %v174, 1e-05
    %v176 = vrsqrt.pop %v175
    %v177 = vld [vmem:[%s1] sm:$0x1]
    %v178 = vmul.f32 %v177, %v176
    %179 = vst [vmem:[%s3] sm:$0x1] %v178
    %v180 = vld [vmem:[%s2] sm:$0x1]
    %v181 = vmul.f32 %v170, %v178
    %v182 = vsub.f32 %v180, %v181
    %183 = vst [vmem:[%s4] sm:$0x1] %v182
  $region21: #{dense_block_forward.4} parent=0 // pred_fallthru
    _
  // Predicated region
  $region22: #{dense_block_forward.4} parent=0 // pred_check
    _
  $region23: #{dense_block_forward.4} parent=0 // pred_check_branch
    %185 = sbr.rel (0) target = $region25
  $region24: #{dense_block_forward.4} parent=0 // pred_region
    _
  $region25: #{dense_block_forward.4} parent=0 // pred_fallthru
    _
  // Predicated region
  $region26: #{dense_block_forward.4} parent=0 // pred_check
    _
  $region27: #{dense_block_forward.4} parent=0 // pred_check_branch
    %187 = sbr.rel (0) target = $region29
  $region28: #{dense_block_forward.4} parent=0 // pred_region
    _
  $region29: #{dense_block_forward.4} parent=0 // pred_fallthru
    _
  // Predicated region
  $region30: #{dense_block_forward.4} parent=0 // pred_check
    _
  $region31: #{dense_block_forward.4} parent=0 // pred_check_branch
    %189 = sbr.rel (0) target = $region33
  $region32: #{dense_block_forward.4} parent=0 // pred_region
    _
  $region33: #{dense_block_forward.4} parent=0 // pred_fallthru
    _
  // Predicated region
  $region34: #{dense_block_forward.4} parent=0 // pred_check
    _
  $region35: #{dense_block_forward.4} parent=0 // pred_check_branch
    %191 = sbr.rel (0) target = $region37
  $region36: #{dense_block_forward.4} parent=0 // pred_region
    _
  $region37: #{dense_block_forward.4} parent=0 // pred_fallthru
    _

// kernel: dense_block_forward.5
$region0: #{dense_block_forward.5}
  #allocation0 [shape = 'u32[]', space=smem, size = 0x4, offset = 0x4, fixed_abs, tag = 'smem constant byte address 0x4 - core index']
  #allocation1 [shape = 'u32[144,128]{1,0:T(1,128)}', space=vmem, size = 0x12000, scoped, tag = 'internal scratch']
  %s0 = inlined_call_operand.vmem [shape: f32[4,8,8,128], index: 0, kind: input, shape index: {}, may-alias: {0,5}]
  %s1 = inlined_call_operand.vmem [shape: f32[1,128], index: 1, kind: input, shape index: {}]
  %s2 = inlined_call_operand.vmem [shape: f32[1,128], index: 2, kind: input, shape index: {}]
  %s3 = inlined_call_operand.vmem [shape: bf16[1152,128], index: 3, kind: input, shape index: {}]
  %s4 = inlined_call_operand.vmem [shape: f32[1,128], index: 4, kind: input, shape index: {}]
  %s5 = inlined_call_operand.vmem [shape: f32[4,8,8,128], index: 5, kind: output, shape index: {}, may-alias: {0,5}]
  %s6 = sld [smem:[#allocation0]]
  $region30: #{dense_block_forward.5} parent=0
    _
  %s8 = ssub.s32 1, %s6
  %s9 = scalar_select 0, %s8, %s6
  // Predicated region
  $region2: #{dense_block_forward.5} parent=0 // pred_check
    _
  $region3: #{dense_block_forward.5} parent=0 // pred_check_branch
    %11 = sbr.rel (0) target = $region5
  $region4: #{dense_block_forward.5} parent=0 // pred_region
    _
  $region5: #{dense_block_forward.5} parent=0 // pred_fallthru
    _
  // Predicated region
  $region6: #{dense_block_forward.5} parent=0 // pred_check
    _
  $region7: #{dense_block_forward.5} parent=0 // pred_check_branch
    %13 = sbr.rel (0) target = $region9
  $region8: #{dense_block_forward.5} parent=0 // pred_region
    _
  $region9: #{dense_block_forward.5} parent=0 // pred_fallthru
    _
  // Predicated region
  $region10: #{dense_block_forward.5} parent=0 // pred_check
    _
  $region11: #{dense_block_forward.5} parent=0 // pred_check_branch
    %15 = sbr.rel (0) target = $region13
  $region12: #{dense_block_forward.5} parent=0 // pred_region
    _
  $region13: #{dense_block_forward.5} parent=0 // pred_fallthru
    _
  // Predicated region
  $region14: #{dense_block_forward.5} parent=0 // pred_check
    _
  $region15: #{dense_block_forward.5} parent=0 // pred_check_branch
    %17 = sbr.rel (0) target = $region17
  $region16: #{dense_block_forward.5} parent=0 // pred_region
    _
  $region17: #{dense_block_forward.5} parent=0 // pred_fallthru
    _
  // Predicated region
  $region18: #{dense_block_forward.5} parent=0 // pred_check
    _
  $region19: #{dense_block_forward.5} parent=0 // pred_check_branch
    %19 = sbr.rel (0) target = $region21
  $region20: #{dense_block_forward.5} parent=0 // pred_region
    _
  $region21: #{dense_block_forward.5} parent=0 // pred_fallthru
    _
  %v21 = vld [vmem:[%s0] sm:$0xff]
  %v22 = vld [vmem:[%s0 + $0x8] sm:$0xff]
  %v23 = vld [vmem:[%s0 + $0x10] sm:$0xff]
  %v24 = vld [vmem:[%s0 + $0x18] sm:$0xff]
  %v25 = vld [vmem:[%s0 + $0x20] sm:$0xff]
  %v26 = vld [vmem:[%s0 + $0x28] sm:$0xff]
  %v27 = vld [vmem:[%s0 + $0x30] sm:$0xff]
  %v28 = vld [vmem:[%s0 + $0x38] sm:$0xff]
  %v29 = vld [vmem:[%s0 + $0x40] sm:$0xff]
  %v30 = vld [vmem:[%s0 + $0x48] sm:$0xff]
  %v31 = vld [vmem:[%s0 + $0x50] sm:$0xff]
  %v32 = vld [vmem:[%s0 + $0x58] sm:$0xff]
  %v33 = vld [vmem:[%s0 + $0x60] sm:$0xff]
  %v34 = vld [vmem:[%s0 + $0x68] sm:$0xff]
  %v35 = vld [vmem:[%s0 + $0x70] sm:$0xff]
  %v36 = vld [vmem:[%s0 + $0x78] sm:$0xff]
  %v37 = vld [vmem:[%s0 + $0x80] sm:$0xff]
  %v38 = vld [vmem:[%s0 + $0x88] sm:$0xff]
  %v39 = vld [vmem:[%s0 + $0x90] sm:$0xff]
  %v40 = vld [vmem:[%s0 + $0x98] sm:$0xff]
  %v41 = vld [vmem:[%s0 + $0xa0] sm:$0xff]
  %v42 = vld [vmem:[%s0 + $0xa8] sm:$0xff]
  %v43 = vld [vmem:[%s0 + $0xb0] sm:$0xff]
  %v44 = vld [vmem:[%s0 + $0xb8] sm:$0xff]
  %v45 = vld [vmem:[%s0 + $0xc0] sm:$0xff]
  %v46 = vld [vmem:[%s0 + $0xc8] sm:$0xff]
  %v47 = vld [vmem:[%s0 + $0xd0] sm:$0xff]
  %v48 = vld [vmem:[%s0 + $0xd8] sm:$0xff]
  %v49 = vld [vmem:[%s0 + $0xe0] sm:$0xff]
  %v50 = vld [vmem:[%s0 + $0xe8] sm:$0xff]
  %v51 = vld [vmem:[%s0 + $0xf0] sm:$0xff]
  %v52 = vld [vmem:[%s0 + $0xf8] sm:$0xff]
  %v53 = vld [vmem:[%s1] sm:$0x1]
  %v54 = vld [vmem:[%s2] sm:$0x1]
  %v56 = vlaneseq
  %v57 = vshrl.u32 %v56, 7
  %v58 = vsub.s32 0, %v57
  %v59 = vrot.slane %v53, %v58
  %v61 = vmul.f32 %v21, %v59
  %v62 = vmul.f32 %v22, %v59
  %v63 = vmul.f32 %v23, %v59
  %v64 = vmul.f32 %v24, %v59
  %v65 = vmul.f32 %v25, %v59
  %v66 = vmul.f32 %v26, %v59
  %v67 = vmul.f32 %v27, %v59
  %v68 = vmul.f32 %v28, %v59
  %v69 = vmul.f32 %v29, %v59
  %v70 = vmul.f32 %v30, %v59
  %v71 = vmul.f32 %v31, %v59
  %v72 = vmul.f32 %v32, %v59
  %v73 = vmul.f32 %v33, %v59
  %v74 = vmul.f32 %v34, %v59
  %v75 = vmul.f32 %v35, %v59
  %v76 = vmul.f32 %v36, %v59
  %v77 = vmul.f32 %v37, %v59
  %v78 = vmul.f32 %v38, %v59
  %v79 = vmul.f32 %v39, %v59
  %v80 = vmul.f32 %v40, %v59
  %v81 = vmul.f32 %v41, %v59
  %v82 = vmul.f32 %v42, %v59
  %v83 = vmul.f32 %v43, %v59
  %v84 = vmul.f32 %v44, %v59
  %v85 = vmul.f32 %v45, %v59
  %v86 = vmul.f32 %v46, %v59
  %v87 = vmul.f32 %v47, %v59
  %v88 = vmul.f32 %v48, %v59
  %v89 = vmul.f32 %v49, %v59
  %v90 = vmul.f32 %v50, %v59
  %v91 = vmul.f32 %v51, %v59
  %v92 = vmul.f32 %v52, %v59
  %v94 = vlaneseq
  %v95 = vshrl.u32 %v94, 7
  %v96 = vsub.s32 0, %v95
  %v97 = vrot.slane %v54, %v96
  %v99 = vadd.f32 %v61, %v97
  %v100 = vadd.f32 %v62, %v97
  %v101 = vadd.f32 %v63, %v97
  %v102 = vadd.f32 %v64, %v97
  %v103 = vadd.f32 %v65, %v97
  %v104 = vadd.f32 %v66, %v97
  %v105 = vadd.f32 %v67, %v97
  %v106 = vadd.f32 %v68, %v97
  %v107 = vadd.f32 %v69, %v97
  %v108 = vadd.f32 %v70, %v97
  %v109 = vadd.f32 %v71, %v97
  %v110 = vadd.f32 %v72, %v97
  %v111 = vadd.f32 %v73, %v97
  %v112 = vadd.f32 %v74, %v97
  %v113 = vadd.f32 %v75, %v97
  %v114 = vadd.f32 %v76, %v97
  %v115 = vadd.f32 %v77, %v97
  %v116 = vadd.f32 %v78, %v97
  %v117 = vadd.f32 %v79, %v97
  %v118 = vadd.f32 %v80, %v97
  %v119 = vadd.f32 %v81, %v97
  %v120 = vadd.f32 %v82, %v97
  %v121 = vadd.f32 %v83, %v97
  %v122 = vadd.f32 %v84, %v97
  %v123 = vadd.f32 %v85, %v97
  %v124 = vadd.f32 %v86, %v97
  %v125 = vadd.f32 %v87, %v97
  %v126 = vadd.f32 %v88, %v97
  %v127 = vadd.f32 %v89, %v97
  %v128 = vadd.f32 %v90, %v97
  %v129 = vadd.f32 %v91, %v97
  %v130 = vadd.f32 %v92, %v97
  %v131 = vmax.f32 %v99, 0.0
  %v132 = vmax.f32 %v100, 0.0
  %v133 = vmax.f32 %v101, 0.0
  %v134 = vmax.f32 %v102, 0.0
  %v135 = vmax.f32 %v103, 0.0
  %v136 = vmax.f32 %v104, 0.0
  %v137 = vmax.f32 %v105, 0.0
  %v138 = vmax.f32 %v106, 0.0
  %v139 = vmax.f32 %v107, 0.0
  %v140 = vmax.f32 %v108, 0.0
  %v141 = vmax.f32 %v109, 0.0
  %v142 = vmax.f32 %v110, 0.0
  %v143 = vmax.f32 %v111, 0.0
  %v144 = vmax.f32 %v112, 0.0
  %v145 = vmax.f32 %v113, 0.0
  %v146 = vmax.f32 %v114, 0.0
  %v147 = vmax.f32 %v115, 0.0
  %v148 = vmax.f32 %v116, 0.0
  %v149 = vmax.f32 %v117, 0.0
  %v150 = vmax.f32 %v118, 0.0
  %v151 = vmax.f32 %v119, 0.0
  %v152 = vmax.f32 %v120, 0.0
  %v153 = vmax.f32 %v121, 0.0
  %v154 = vmax.f32 %v122, 0.0
  %v155 = vmax.f32 %v123, 0.0
  %v156 = vmax.f32 %v124, 0.0
  %v157 = vmax.f32 %v125, 0.0
  %v158 = vmax.f32 %v126, 0.0
  %v159 = vmax.f32 %v127, 0.0
  %v160 = vmax.f32 %v128, 0.0
  %v161 = vmax.f32 %v129, 0.0
  %v162 = vmax.f32 %v130, 0.0
  %v196 = vrot.slane 0.0, 7
  %v197 = vrot.slane %v131, 7
  %v198 = vrot.slane %v132, 7
  %v199 = vrot.slane %v133, 7
  %v200 = vrot.slane %v134, 7
  %v201 = vrot.slane %v135, 7
  %v202 = vrot.slane %v136, 7
  %v203 = vrot.slane %v137, 7
  %v204 = vrot.slane %v138, 7
  %v205 = vrot.slane %v139, 7
  %v206 = vrot.slane %v140, 7
  %v207 = vrot.slane %v141, 7
  %v208 = vrot.slane %v142, 7
  %v209 = vrot.slane %v143, 7
  %v210 = vrot.slane %v144, 7
  %v211 = vrot.slane %v145, 7
  %v212 = vrot.slane %v146, 7
  %v213 = vrot.slane %v147, 7
  %v214 = vrot.slane %v148, 7
  %v215 = vrot.slane %v149, 7
  %v216 = vrot.slane %v150, 7
  %v217 = vrot.slane %v151, 7
  %v218 = vrot.slane %v152, 7
  %v219 = vrot.slane %v153, 7
  %v220 = vrot.slane %v154, 7
  %v221 = vrot.slane %v155, 7
  %v222 = vrot.slane %v156, 7
  %v223 = vrot.slane %v157, 7
  %v224 = vrot.slane %v158, 7
  %v225 = vrot.slane %v159, 7
  %v226 = vrot.slane %v160, 7
  %v227 = vrot.slane %v161, 7
  %v228 = vrot.slane %v162, 7
  %vm262 = vcmask 1040384
  %v263 = vsel %vm262, 0.0, %v196
  %v264 = vsel %vm262, 0.0, %v197
  %v265 = vsel %vm262, 0.0, %v198
  %v266 = vsel %vm262, 0.0, %v199
  %v267 = vsel %vm262, 0.0, %v200
  %v268 = vsel %vm262, 0.0, %v201
  %v269 = vsel %vm262, 0.0, %v202
  %v270 = vsel %vm262, 0.0, %v203
  %v271 = vsel %vm262, 0.0, %v204
  %v272 = vsel %vm262, 0.0, %v205
  %v273 = vsel %vm262, 0.0, %v206
  %v274 = vsel %vm262, 0.0, %v207
  %v275 = vsel %vm262, 0.0, %v208
  %v276 = vsel %vm262, 0.0, %v209
  %v277 = vsel %vm262, 0.0, %v210
  %v278 = vsel %vm262, 0.0, %v211
  %v279 = vsel %vm262, 0.0, %v212
  %v280 = vsel %vm262, 0.0, %v213
  %v281 = vsel %vm262, 0.0, %v214
  %v282 = vsel %vm262, 0.0, %v215
  %v283 = vsel %vm262, 0.0, %v216
  %v284 = vsel %vm262, 0.0, %v217
  %v285 = vsel %vm262, 0.0, %v218
  %v286 = vsel %vm262, 0.0, %v219
  %v287 = vsel %vm262, 0.0, %v220
  %v288 = vsel %vm262, 0.0, %v221
  %v289 = vsel %vm262, 0.0, %v222
  %v290 = vsel %vm262, 0.0, %v223
  %v291 = vsel %vm262, 0.0, %v224
  %v292 = vsel %vm262, 0.0, %v225
  %v293 = vsel %vm262, 0.0, %v226
  %v294 = vsel %vm262, 0.0, %v227
  %v295 = vsel %vm262, 0.0, %v228
  %v296 = vsel %vm262, %v196, 0.0
  %v297 = vsel %vm262, %v197, 0.0
  %v298 = vsel %vm262, %v198, 0.0
  %v299 = vsel %vm262, %v199, 0.0
  %v300 = vsel %vm262, %v200, 0.0
  %v301 = vsel %vm262, %v201, 0.0
  %v302 = vsel %vm262, %v202, 0.0
  %v303 = vsel %vm262, %v203, 0.0
  %v304 = vsel %vm262, %v204, 0.0
  %v305 = vsel %vm262, %v205, 0.0
  %v306 = vsel %vm262, %v206, 0.0
  %v307 = vsel %vm262, %v207, 0.0
  %v308 = vsel %vm262, %v208, 0.0
  %v309 = vsel %vm262, %v209, 0.0
  %v310 = vsel %vm262, %v210, 0.0
  %v311 = vsel %vm262, %v211, 0.0
  %v312 = vsel %vm262, %v212, 0.0
  %v313 = vsel %vm262, %v213, 0.0
  %v314 = vsel %vm262, %v214, 0.0
  %v315 = vsel %vm262, %v215, 0.0
  %v316 = vsel %vm262, %v216, 0.0
  %v317 = vsel %vm262, %v217, 0.0
  %v318 = vsel %vm262, %v218, 0.0
  %v319 = vsel %vm262, %v219, 0.0
  %v320 = vsel %vm262, %v220, 0.0
  %v321 = vsel %vm262, %v221, 0.0
  %v322 = vsel %vm262, %v222, 0.0
  %v323 = vsel %vm262, %v223, 0.0
  %v324 = vsel %vm262, %v224, 0.0
  %v325 = vsel %vm262, %v225, 0.0
  %v326 = vsel %vm262, %v226, 0.0
  %v327 = vsel %vm262, %v227, 0.0
  %v328 = vsel %vm262, %v228, 0.0
  %vm387 = vcmask 1046528
  %v388 = vrot.slane %v263, 1
  %v389 = vrot.slane %v296, 1
  %v390 = vsel %vm387, %v388, %v389
  %v391 = vrot.slane %v264, 1
  %v392 = vrot.slane %v297, 1
  %v393 = vsel %vm387, %v391, %v392
  %v394 = vrot.slane %v265, 1
  %v395 = vrot.slane %v298, 1
  %v396 = vsel %vm387, %v394, %v395
  %v397 = vrot.slane %v266, 1
  %v398 = vrot.slane %v299, 1
  %v399 = vsel %vm387, %v397, %v398
  %v400 = vrot.slane %v267, 1
  %v401 = vrot.slane %v300, 1
  %v402 = vsel %vm387, %v400, %v401
  %v403 = vrot.slane %v268, 1
  %v404 = vrot.slane %v301, 1
  %v405 = vsel %vm387, %v403, %v404
  %v406 = vrot.slane %v269, 1
  %v407 = vrot.slane %v302, 1
  %v408 = vsel %vm387, %v406, %v407
  %v409 = vrot.slane %v270, 1
  %v410 = vrot.slane %v303, 1
  %v411 = vsel %vm387, %v409, %v410
  %v412 = vrot.slane %v272, 1
  %v413 = vrot.slane %v305, 1
  %v414 = vsel %vm387, %v412, %v413
  %v415 = vrot.slane %v273, 1
  %v416 = vrot.slane %v306, 1
  %v417 = vsel %vm387, %v415, %v416
  %v418 = vrot.slane %v274, 1
  %v419 = vrot.slane %v307, 1
  %v420 = vsel %vm387, %v418, %v419
  %v421 = vrot.slane %v275, 1
  %v422 = vrot.slane %v308, 1
  %v423 = vsel %vm387, %v421, %v422
  %v424 = vrot.slane %v276, 1
  %v425 = vrot.slane %v309, 1
  %v426 = vsel %vm387, %v424, %v425
  %v427 = vrot.slane %v277, 1
  %v428 = vrot.slane %v310, 1
  %v429 = vsel %vm387, %v427, %v428
  %v430 = vrot.slane %v278, 1
  %v431 = vrot.slane %v311, 1
  %v432 = vsel %vm387, %v430, %v431
  %v433 = vrot.slane %v280, 1
  %v434 = vrot.slane %v313, 1
  %v435 = vsel %vm387, %v433, %v434
  %v436 = vrot.slane %v281, 1
  %v437 = vrot.slane %v314, 1
  %v438 = vsel %vm387, %v436, %v437
  %v439 = vrot.slane %v282, 1
  %v440 = vrot.slane %v315, 1
  %v441 = vsel %vm387, %v439, %v440
  %v442 = vrot.slane %v283, 1
  %v443 = vrot.slane %v316, 1
  %v444 = vsel %vm387, %v442, %v443
  %v445 = vrot.slane %v284, 1
  %v446 = vrot.slane %v317, 1
  %v447 = vsel %vm387, %v445, %v446
  %v448 = vrot.slane %v285, 1
  %v449 = vrot.slane %v318, 1
  %v450 = vsel %vm387, %v448, %v449
  %v451 = vrot.slane %v286, 1
  %v452 = vrot.slane %v319, 1
  %v453 = vsel %vm387, %v451, %v452
  %v454 = vrot.slane %v288, 1
  %v455 = vrot.slane %v321, 1
  %v456 = vsel %vm387, %v454, %v455
  %v457 = vrot.slane %v289, 1
  %v458 = vrot.slane %v322, 1
  %v459 = vsel %vm387, %v457, %v458
  %v460 = vrot.slane %v290, 1
  %v461 = vrot.slane %v323, 1
  %v462 = vsel %vm387, %v460, %v461
  %v463 = vrot.slane %v291, 1
  %v464 = vrot.slane %v324, 1
  %v465 = vsel %vm387, %v463, %v464
  %v466 = vrot.slane %v292, 1
  %v467 = vrot.slane %v325, 1
  %v468 = vsel %vm387, %v466, %v467
  %v469 = vrot.slane %v293, 1
  %v470 = vrot.slane %v326, 1
  %v471 = vsel %vm387, %v469, %v470
  %v472 = vrot.slane %v294, 1
  %v473 = vrot.slane %v327, 1
  %v474 = vsel %vm387, %v472, %v473
  %vm504 = vcmask 1045504
  %v505 = vrot.slane %v263, 2
  %v506 = vrot.slane %v296, 2
  %v507 = vsel %vm504, %v505, %v506
  %v508 = vrot.slane %v264, 2
  %v509 = vrot.slane %v297, 2
  %v510 = vsel %vm504, %v508, %v509
  %v511 = vrot.slane %v265, 2
  %v512 = vrot.slane %v298, 2
  %v513 = vsel %vm504, %v511, %v512
  %v514 = vrot.slane %v266, 2
  %v515 = vrot.slane %v299, 2
  %v516 = vsel %vm504, %v514, %v515
  %v517 = vrot.slane %v267, 2
  %v518 = vrot.slane %v300, 2
  %v519 = vsel %vm504, %v517, %v518
  %v520 = vrot.slane %v268, 2
  %v521 = vrot.slane %v301, 2
  %v522 = vsel %vm504, %v520, %v521
  %v523 = vrot.slane %v269, 2
  %v524 = vrot.slane %v302, 2
  %v525 = vsel %vm504, %v523, %v524
  %v526 = vrot.slane %v270, 2
  %v527 = vrot.slane %v303, 2
  %v528 = vsel %vm504, %v526, %v527
  %v529 = vrot.slane %v272, 2
  %v530 = vrot.slane %v305, 2
  %v531 = vsel %vm504, %v529, %v530
  %v532 = vrot.slane %v273, 2
  %v533 = vrot.slane %v306, 2
  %v534 = vsel %vm504, %v532, %v533
  %v535 = vrot.slane %v274, 2
  %v536 = vrot.slane %v307, 2
  %v537 = vsel %vm504, %v535, %v536
  %v538 = vrot.slane %v275, 2
  %v539 = vrot.slane %v308, 2
  %v540 = vsel %vm504, %v538, %v539
  %v541 = vrot.slane %v276, 2
  %v542 = vrot.slane %v309, 2
  %v543 = vsel %vm504, %v541, %v542
  %v544 = vrot.slane %v277, 2
  %v545 = vrot.slane %v310, 2
  %v546 = vsel %vm504, %v544, %v545
  %v547 = vrot.slane %v278, 2
  %v548 = vrot.slane %v311, 2
  %v549 = vsel %vm504, %v547, %v548
  %v550 = vrot.slane %v280, 2
  %v551 = vrot.slane %v313, 2
  %v552 = vsel %vm504, %v550, %v551
  %v553 = vrot.slane %v281, 2
  %v554 = vrot.slane %v314, 2
  %v555 = vsel %vm504, %v553, %v554
  %v556 = vrot.slane %v282, 2
  %v557 = vrot.slane %v315, 2
  %v558 = vsel %vm504, %v556, %v557
  %v559 = vrot.slane %v283, 2
  %v560 = vrot.slane %v316, 2
  %v561 = vsel %vm504, %v559, %v560
  %v562 = vrot.slane %v284, 2
  %v563 = vrot.slane %v317, 2
  %v564 = vsel %vm504, %v562, %v563
  %v565 = vrot.slane %v285, 2
  %v566 = vrot.slane %v318, 2
  %v567 = vsel %vm504, %v565, %v566
  %v568 = vrot.slane %v286, 2
  %v569 = vrot.slane %v319, 2
  %v570 = vsel %vm504, %v568, %v569
  %v571 = vrot.slane %v288, 2
  %v572 = vrot.slane %v321, 2
  %v573 = vsel %vm504, %v571, %v572
  %v574 = vrot.slane %v289, 2
  %v575 = vrot.slane %v322, 2
  %v576 = vsel %vm504, %v574, %v575
  %v577 = vrot.slane %v290, 2
  %v578 = vrot.slane %v323, 2
  %v579 = vsel %vm504, %v577, %v578
  %v580 = vrot.slane %v291, 2
  %v581 = vrot.slane %v324, 2
  %v582 = vsel %vm504, %v580, %v581
  %v583 = vrot.slane %v292, 2
  %v584 = vrot.slane %v325, 2
  %v585 = vsel %vm504, %v583, %v584
  %v586 = vrot.slane %v293, 2
  %v587 = vrot.slane %v326, 2
  %v588 = vsel %vm504, %v586, %v587
  %v589 = vrot.slane %v294, 2
  %v590 = vrot.slane %v327, 2
  %v591 = vsel %vm504, %v589, %v590
  %v629 = vrot.slane %v271, 1
  %v630 = vrot.slane %v304, 1
  %v631 = vsel %vm387, %v629, %v630
  %v632 = vrot.slane %v279, 1
  %v633 = vrot.slane %v312, 1
  %v634 = vsel %vm387, %v632, %v633
  %v635 = vrot.slane %v287, 1
  %v636 = vrot.slane %v320, 1
  %v637 = vsel %vm387, %v635, %v636
  %v638 = vrot.slane %v295, 1
  %v639 = vrot.slane %v328, 1
  %v640 = vsel %vm387, %v638, %v639
  %v645 = vrot.slane %v271, 2
  %v646 = vrot.slane %v304, 2
  %v647 = vsel %vm504, %v645, %v646
  %v648 = vrot.slane %v279, 2
  %v649 = vrot.slane %v312, 2
  %v650 = vsel %vm504, %v648, %v649
  %v651 = vrot.slane %v287, 2
  %v652 = vrot.slane %v320, 2
  %v653 = vsel %vm504, %v651, %v652
  %v654 = vrot.slane %v295, 2
  %v655 = vrot.slane %v328, 2
  %v656 = vsel %vm504, %v654, %v655
  %v661 = vpack.c.bf16 %v264, %v263
  %v662 = vpack.c.bf16 %v393, %v390
  %v663 = vpack.c.bf16 %v510, %v507
  %v664 = vpack.c.bf16 %v265, %v264
  %v665 = vpack.c.bf16 %v396, %v393
  %v666 = vpack.c.bf16 %v513, %v510
  %v667 = vpack.c.bf16 %v266, %v265
  %v668 = vpack.c.bf16 %v399, %v396
  %v669 = vpack.c.bf16 %v516, %v513
  %v670 = vpack.c.bf16 %v267, %v266
  %v671 = vpack.c.bf16 %v402, %v399
  %v672 = vpack.c.bf16 %v519, %v516
  %v673 = vpack.c.bf16 %v268, %v267
  %v674 = vpack.c.bf16 %v405, %v402
  %v675 = vpack.c.bf16 %v522, %v519
  %v676 = vpack.c.bf16 %v269, %v268
  %v677 = vpack.c.bf16 %v408, %v405
  %v678 = vpack.c.bf16 %v525, %v522
  %v679 = vpack.c.bf16 %v270, %v269
  %v680 = vpack.c.bf16 %v411, %v408
  %v681 = vpack.c.bf16 %v528, %v525
  %v682 = vpack.c.bf16 %v271, %v270
  %v683 = vpack.c.bf16 %v631, %v411
  %v684 = vpack.c.bf16 %v647, %v528
  %v685 = vpack.c.bf16 %v263, %v271
  %v686 = vpack.c.bf16 %v390, %v631
  %v687 = vpack.c.bf16 %v507, %v647
  %v688 = vpack.c.bf16 %v272, %v263
  %v689 = vpack.c.bf16 %v414, %v390
  %v690 = vpack.c.bf16 %v531, %v507
  %v691 = vpack.c.bf16 %v273, %v272
  %v692 = vpack.c.bf16 %v417, %v414
  %v693 = vpack.c.bf16 %v534, %v531
  %v694 = vpack.c.bf16 %v274, %v273
  %v695 = vpack.c.bf16 %v420, %v417
  %v696 = vpack.c.bf16 %v537, %v534
  %v697 = vpack.c.bf16 %v275, %v274
  %v698 = vpack.c.bf16 %v423, %v420
  %v699 = vpack.c.bf16 %v540, %v537
  %v700 = vpack.c.bf16 %v276, %v275
  %v701 = vpack.c.bf16 %v426, %v423
  %v702 = vpack.c.bf16 %v543, %v540
  %v703 = vpack.c.bf16 %v277, %v276
  %v704 = vpack.c.bf16 %v429, %v426
  %v705 = vpack.c.bf16 %v546, %v543
  %v706 = vpack.c.bf16 %v278, %v277
  %v707 = vpack.c.bf16 %v432, %v429
  %v708 = vpack.c.bf16 %v549, %v546
  %v709 = vpack.c.bf16 %v279, %v278
  %v710 = vpack.c.bf16 %v634, %v432
  %v711 = vpack.c.bf16 %v650, %v549
  %v712 = vpack.c.bf16 %v263, %v279
  %v713 = vpack.c.bf16 %v390, %v634
  %v714 = vpack.c.bf16 %v507, %v650
  %v715 = vpack.c.bf16 %v280, %v263
  %v716 = vpack.c.bf16 %v435, %v390
  %v717 = vpack.c.bf16 %v552, %v507
  %v718 = vpack.c.bf16 %v281, %v280
  %v719 = vpack.c.bf16 %v438, %v435
  %v720 = vpack.c.bf16 %v555, %v552
  %v721 = vpack.c.bf16 %v282, %v281
  %v722 = vpack.c.bf16 %v441, %v438
  %v723 = vpack.c.bf16 %v558, %v555
  %v724 = vpack.c.bf16 %v283, %v282
  %v725 = vpack.c.bf16 %v444, %v441
  %v726 = vpack.c.bf16 %v561, %v558
  %v727 = vpack.c.bf16 %v284, %v283
  %v728 = vpack.c.bf16 %v447, %v444
  %v729 = vpack.c.bf16 %v564, %v561
  %v730 = vpack.c.bf16 %v285, %v284
  %v731 = vpack.c.bf16 %v450, %v447
  %v732 = vpack.c.bf16 %v567, %v564
  %v733 = vpack.c.bf16 %v286, %v285
  %v734 = vpack.c.bf16 %v453, %v450
  %v735 = vpack.c.bf16 %v570, %v567
  %v736 = vpack.c.bf16 %v287, %v286
  %v737 = vpack.c.bf16 %v637, %v453
  %v738 = vpack.c.bf16 %v653, %v570
  %v739 = vpack.c.bf16 %v263, %v287
  %v740 = vpack.c.bf16 %v390, %v637
  %v741 = vpack.c.bf16 %v507, %v653
  %v742 = vpack.c.bf16 %v288, %v263
  %v743 = vpack.c.bf16 %v456, %v390
  %v744 = vpack.c.bf16 %v573, %v507
  %v745 = vpack.c.bf16 %v289, %v288
  %v746 = vpack.c.bf16 %v459, %v456
  %v747 = vpack.c.bf16 %v576, %v573
  %v748 = vpack.c.bf16 %v290, %v289
  %v749 = vpack.c.bf16 %v462, %v459
  %v750 = vpack.c.bf16 %v579, %v576
  %v751 = vpack.c.bf16 %v291, %v290
  %v752 = vpack.c.bf16 %v465, %v462
  %v753 = vpack.c.bf16 %v582, %v579
  %v754 = vpack.c.bf16 %v292, %v291
  %v755 = vpack.c.bf16 %v468, %v465
  %v756 = vpack.c.bf16 %v585, %v582
  %v757 = vpack.c.bf16 %v293, %v292
  %v758 = vpack.c.bf16 %v471, %v468
  %v759 = vpack.c.bf16 %v588, %v585
  %v760 = vpack.c.bf16 %v294, %v293
  %v761 = vpack.c.bf16 %v474, %v471
  %v762 = vpack.c.bf16 %v591, %v588
  %v763 = vpack.c.bf16 %v295, %v294
  %v764 = vpack.c.bf16 %v640, %v474
  %v765 = vpack.c.bf16 %v656, %v591
  %v766 = vpack.c.bf16 %v263, %v295
  %v767 = vpack.c.bf16 %v390, %v640
  %v768 = vpack.c.bf16 %v507, %v656
  %v769 = vld [vmem:[%s3] sm:$0xf]
  %v770 = vld [vmem:[%s3 + $0x4] sm:$0xf]
  %v771 = vld [vmem:[%s3 + $0x8] sm:$0xf]
  %v772 = vld [vmem:[%s3 + $0xc] sm:$0xf]
  %v773 = vld [vmem:[%s3 + $0x10] sm:$0xf]
  %v774 = vld [vmem:[%s3 + $0x14] sm:$0xf]
  %v775 = vld [vmem:[%s3 + $0x18] sm:$0xf]
  %v776 = vld [vmem:[%s3 + $0x1c] sm:$0xf]
  %v777 = vld [vmem:[%s3 + $0x20] sm:$0xf]
  %v778 = vld [vmem:[%s3 + $0x24] sm:$0xf]
  %v779 = vld [vmem:[%s3 + $0x28] sm:$0xf]
  %v780 = vld [vmem:[%s3 + $0x2c] sm:$0xf]
  %v781 = vld [vmem:[%s3 + $0x30] sm:$0xf]
  %v782 = vld [vmem:[%s3 + $0x34] sm:$0xf]
  %v783 = vld [vmem:[%s3 + $0x38] sm:$0xf]
  %v784 = vld [vmem:[%s3 + $0x3c] sm:$0xf]
  %v785 = vld [vmem:[%s3 + $0x40] sm:$0xf]
  %v786 = vld [vmem:[%s3 + $0x44] sm:$0xf]
  %v787 = vld [vmem:[%s3 + $0x48] sm:$0xf]
  %v788 = vld [vmem:[%s3 + $0x4c] sm:$0xf]
  %v789 = vld [vmem:[%s3 + $0x50] sm:$0xf]
  %v790 = vld [vmem:[%s3 + $0x54] sm:$0xf]
  %v791 = vld [vmem:[%s3 + $0x58] sm:$0xf]
  %v792 = vld [vmem:[%s3 + $0x5c] sm:$0xf]
  %v793 = vld [vmem:[%s3 + $0x60] sm:$0xf]
  %v794 = vld [vmem:[%s3 + $0x64] sm:$0xf]
  %v795 = vld [vmem:[%s3 + $0x68] sm:$0xf]
  %v796 = vld [vmem:[%s3 + $0x6c] sm:$0xf]
  %v797 = vld [vmem:[%s3 + $0x70] sm:$0xf]
  %v798 = vld [vmem:[%s3 + $0x74] sm:$0xf]
  %v799 = vld [vmem:[%s3 + $0x78] sm:$0xf]
  %v800 = vld [vmem:[%s3 + $0x7c] sm:$0xf]
  %v801 = vld [vmem:[%s3 + $0x80] sm:$0xf]
  %v802 = vld [vmem:[%s3 + $0x84] sm:$0xf]
  %v803 = vld [vmem:[%s3 + $0x88] sm:$0xf]
  %v804 = vld [vmem:[%s3 + $0x8c] sm:$0xf]
  %v805 = vld [vmem:[%s3 + $0x90] sm:$0xf]
  %v806 = vld [vmem:[%s3 + $0x94] sm:$0xf]
  %v807 = vld [vmem:[%s3 + $0x98] sm:$0xf]
  %v808 = vld [vmem:[%s3 + $0x9c] sm:$0xf]
  %v809 = vld [vmem:[%s3 + $0xa0] sm:$0xf]
  %v810 = vld [vmem:[%s3 + $0xa4] sm:$0xf]
  %v811 = vld [vmem:[%s3 + $0xa8] sm:$0xf]
  %v812 = vld [vmem:[%s3 + $0xac] sm:$0xf]
  %v813 = vld [vmem:[%s3 + $0xb0] sm:$0xf]
  %v814 = vld [vmem:[%s3 + $0xb4] sm:$0xf]
  %v815 = vld [vmem:[%s3 + $0xb8] sm:$0xf]
  %v816 = vld [vmem:[%s3 + $0xbc] sm:$0xf]
  %v817 = vld [vmem:[%s3 + $0xc0] sm:$0xf]
  %v818 = vld [vmem:[%s3 + $0xc4] sm:$0xf]
  %v819 = vld [vmem:[%s3 + $0xc8] sm:$0xf]
  %v820 = vld [vmem:[%s3 + $0xcc] sm:$0xf]
  %v821 = vld [vmem:[%s3 + $0xd0] sm:$0xf]
  %v822 = vld [vmem:[%s3 + $0xd4] sm:$0xf]
  %v823 = vld [vmem:[%s3 + $0xd8] sm:$0xf]
  %v824 = vld [vmem:[%s3 + $0xdc] sm:$0xf]
  %v825 = vld [vmem:[%s3 + $0xe0] sm:$0xf]
  %v826 = vld [vmem:[%s3 + $0xe4] sm:$0xf]
  %v827 = vld [vmem:[%s3 + $0xe8] sm:$0xf]
  %v828 = vld [vmem:[%s3 + $0xec] sm:$0xf]
  %v829 = vld [vmem:[%s3 + $0xf0] sm:$0xf]
  %v830 = vld [vmem:[%s3 + $0xf4] sm:$0xf]
  %v831 = vld [vmem:[%s3 + $0xf8] sm:$0xf]
  %v832 = vld [vmem:[%s3 + $0xfc] sm:$0xf]
  %v833 = vld [vmem:[%s3 + $0x100] sm:$0xf]
  %v834 = vld [vmem:[%s3 + $0x104] sm:$0xf]
  %v835 = vld [vmem:[%s3 + $0x108] sm:$0xf]
  %v836 = vld [vmem:[%s3 + $0x10c] sm:$0xf]
  %v837 = vld [vmem:[%s3 + $0x110] sm:$0xf]
  %v838 = vld [vmem:[%s3 + $0x114] sm:$0xf]
  %v839 = vld [vmem:[%s3 + $0x118] sm:$0xf]
  %v840 = vld [vmem:[%s3 + $0x11c] sm:$0xf]
  %v841 = vld [vmem:[%s3 + $0x120] sm:$0xf]
  %v842 = vld [vmem:[%s3 + $0x124] sm:$0xf]
  %v843 = vld [vmem:[%s3 + $0x128] sm:$0xf]
  %v844 = vld [vmem:[%s3 + $0x12c] sm:$0xf]
  %v845 = vld [vmem:[%s3 + $0x130] sm:$0xf]
  %v846 = vld [vmem:[%s3 + $0x134] sm:$0xf]
  %v847 = vld [vmem:[%s3 + $0x138] sm:$0xf]
  %v848 = vld [vmem:[%s3 + $0x13c] sm:$0xf]
  %v849 = vld [vmem:[%s3 + $0x140] sm:$0xf]
  %v850 = vld [vmem:[%s3 + $0x144] sm:$0xf]
  %v851 = vld [vmem:[%s3 + $0x148] sm:$0xf]
  %v852 = vld [vmem:[%s3 + $0x14c] sm:$0xf]
  %v853 = vld [vmem:[%s3 + $0x150] sm:$0xf]
  %v854 = vld [vmem:[%s3 + $0x154] sm:$0xf]
  %v855 = vld [vmem:[%s3 + $0x158] sm:$0xf]
  %v856 = vld [vmem:[%s3 + $0x15c] sm:$0xf]
  %v857 = vld [vmem:[%s3 + $0x160] sm:$0xf]
  %v858 = vld [vmem:[%s3 + $0x164] sm:$0xf]
  %v859 = vld [vmem:[%s3 + $0x168] sm:$0xf]
  %v860 = vld [vmem:[%s3 + $0x16c] sm:$0xf]
  %v861 = vld [vmem:[%s3 + $0x170] sm:$0xf]
  %v862 = vld [vmem:[%s3 + $0x174] sm:$0xf]
  %v863 = vld [vmem:[%s3 + $0x178] sm:$0xf]
  %v864 = vld [vmem:[%s3 + $0x17c] sm:$0xf]
  %v865 = vld [vmem:[%s3 + $0x180] sm:$0xf]
  %v866 = vld [vmem:[%s3 + $0x184] sm:$0xf]
  %v867 = vld [vmem:[%s3 + $0x188] sm:$0xf]
  %v868 = vld [vmem:[%s3 + $0x18c] sm:$0xf]
  %v869 = vld [vmem:[%s3 + $0x190] sm:$0xf]
  %v870 = vld [vmem:[%s3 + $0x194] sm:$0xf]
  %v871 = vld [vmem:[%s3 + $0x198] sm:$0xf]
  %v872 = vld [vmem:[%s3 + $0x19c] sm:$0xf]
  %v873 = vld [vmem:[%s3 + $0x1a0] sm:$0xf]
  %v874 = vld [vmem:[%s3 + $0x1a4] sm:$0xf]
  %v875 = vld [vmem:[%s3 + $0x1a8] sm:$0xf]
  %v876 = vld [vmem:[%s3 + $0x1ac] sm:$0xf]
  %v877 = vld [vmem:[%s3 + $0x1b0] sm:$0xf]
  %v878 = vld [vmem:[%s3 + $0x1b4] sm:$0xf]
  %v879 = vld [vmem:[%s3 + $0x1b8] sm:$0xf]
  %v880 = vld [vmem:[%s3 + $0x1bc] sm:$0xf]
  %v881 = vld [vmem:[%s3 + $0x1c0] sm:$0xf]
  %v882 = vld [vmem:[%s3 + $0x1c4] sm:$0xf]
  %v883 = vld [vmem:[%s3 + $0x1c8] sm:$0xf]
  %v884 = vld [vmem:[%s3 + $0x1cc] sm:$0xf]
  %v885 = vld [vmem:[%s3 + $0x1d0] sm:$0xf]
  %v886 = vld [vmem:[%s3 + $0x1d4] sm:$0xf]
  %v887 = vld [vmem:[%s3 + $0x1d8] sm:$0xf]
  %v888 = vld [vmem:[%s3 + $0x1dc] sm:$0xf]
  %v889 = vld [vmem:[%s3 + $0x1e0] sm:$0xf]
  %v890 = vld [vmem:[%s3 + $0x1e4] sm:$0xf]
  %v891 = vld [vmem:[%s3 + $0x1e8] sm:$0xf]
  %v892 = vld [vmem:[%s3 + $0x1ec] sm:$0xf]
  %v893 = vld [vmem:[%s3 + $0x1f0] sm:$0xf]
  %v894 = vld [vmem:[%s3 + $0x1f4] sm:$0xf]
  %v895 = vld [vmem:[%s3 + $0x1f8] sm:$0xf]
  %v896 = vld [vmem:[%s3 + $0x1fc] sm:$0xf]
  %v897 = vld [vmem:[%s3 + $0x200] sm:$0xf]
  %v898 = vld [vmem:[%s3 + $0x204] sm:$0xf]
  %v899 = vld [vmem:[%s3 + $0x208] sm:$0xf]
  %v900 = vld [vmem:[%s3 + $0x20c] sm:$0xf]
  %v901 = vld [vmem:[%s3 + $0x210] sm:$0xf]
  %v902 = vld [vmem:[%s3 + $0x214] sm:$0xf]
  %v903 = vld [vmem:[%s3 + $0x218] sm:$0xf]
  %v904 = vld [vmem:[%s3 + $0x21c] sm:$0xf]
  %v905 = vld [vmem:[%s3 + $0x220] sm:$0xf]
  %v906 = vld [vmem:[%s3 + $0x224] sm:$0xf]
  %v907 = vld [vmem:[%s3 + $0x228] sm:$0xf]
  %v908 = vld [vmem:[%s3 + $0x22c] sm:$0xf]
  %v909 = vld [vmem:[%s3 + $0x230] sm:$0xf]
  %v910 = vld [vmem:[%s3 + $0x234] sm:$0xf]
  %v911 = vld [vmem:[%s3 + $0x238] sm:$0xf]
  %v912 = vld [vmem:[%s3 + $0x23c] sm:$0xf]
  %v913 = vld [vmem:[%s4] sm:$0x1]
  %v915 = vlaneseq
  %v916 = vshrl.u32 %v915, 7
  %v917 = vsub.s32 0, %v916
  %v918 = vrot.slane %v913, %v917
  %v1064 = vunpack.c.l.b16 %v769
  %v1065 = vunpack.c.l.b16 %v770
  %v1066 = vunpack.c.l.b16 %v771
  %v1067 = vunpack.c.l.b16 %v772
  %v1068 = vunpack.c.l.b16 %v773
  %v1069 = vunpack.c.l.b16 %v774
  %v1070 = vunpack.c.l.b16 %v775
  %v1071 = vunpack.c.l.b16 %v776
  %v1072 = vunpack.c.l.b16 %v777
  %v1073 = vunpack.c.l.b16 %v778
  %v1074 = vunpack.c.l.b16 %v779
  %v1075 = vunpack.c.l.b16 %v780
  %v1076 = vunpack.c.l.b16 %v781
  %v1077 = vunpack.c.l.b16 %v782
  %v1078 = vunpack.c.l.b16 %v783
  %v1079 = vunpack.c.l.b16 %v784
  %v1080 = vunpack.c.l.b16 %v785
  %v1081 = vunpack.c.l.b16 %v786
  %v1082 = vunpack.c.l.b16 %v787
  %v1083 = vunpack.c.l.b16 %v788
  %v1084 = vunpack.c.l.b16 %v789
  %v1085 = vunpack.c.l.b16 %v790
  %v1086 = vunpack.c.l.b16 %v791
  %v1087 = vunpack.c.l.b16 %v792
  %v1088 = vunpack.c.l.b16 %v793
  %v1089 = vunpack.c.l.b16 %v794
  %v1090 = vunpack.c.l.b16 %v795
  %v1091 = vunpack.c.l.b16 %v796
  %v1092 = vunpack.c.l.b16 %v797
  %v1093 = vunpack.c.l.b16 %v798
  %v1094 = vunpack.c.l.b16 %v799
  %v1095 = vunpack.c.l.b16 %v800
  %v1096 = vunpack.c.l.b16 %v801
  %v1097 = vunpack.c.l.b16 %v802
  %v1098 = vunpack.c.l.b16 %v803
  %v1099 = vunpack.c.l.b16 %v804
  %v1100 = vunpack.c.l.b16 %v805
  %v1101 = vunpack.c.l.b16 %v806
  %v1102 = vunpack.c.l.b16 %v807
  %v1103 = vunpack.c.l.b16 %v808
  %v1104 = vunpack.c.l.b16 %v809
  %v1105 = vunpack.c.l.b16 %v810
  %v1106 = vunpack.c.l.b16 %v811
  %v1107 = vunpack.c.l.b16 %v812
  %v1108 = vunpack.c.l.b16 %v813
  %v1109 = vunpack.c.l.b16 %v814
  %v1110 = vunpack.c.l.b16 %v815
  %v1111 = vunpack.c.l.b16 %v816
  %v1112 = vunpack.c.l.b16 %v817
  %v1113 = vunpack.c.l.b16 %v818
  %v1114 = vunpack.c.l.b16 %v819
  %v1115 = vunpack.c.l.b16 %v820
  %v1116 = vunpack.c.l.b16 %v821
  %v1117 = vunpack.c.l.b16 %v822
  %v1118 = vunpack.c.l.b16 %v823
  %v1119 = vunpack.c.l.b16 %v824
  %v1120 = vunpack.c.l.b16 %v825
  %v1121 = vunpack.c.l.b16 %v826
  %v1122 = vunpack.c.l.b16 %v827
  %v1123 = vunpack.c.l.b16 %v828
  %v1124 = vunpack.c.l.b16 %v829
  %v1125 = vunpack.c.l.b16 %v830
  %v1126 = vunpack.c.l.b16 %v831
  %v1127 = vunpack.c.l.b16 %v832
  %v1128 = vunpack.c.l.b16 %v833
  %v1129 = vunpack.c.l.b16 %v834
  %v1130 = vunpack.c.l.b16 %v835
  %v1131 = vunpack.c.l.b16 %v836
  %v1132 = vunpack.c.l.b16 %v837
  %v1133 = vunpack.c.l.b16 %v838
  %v1134 = vunpack.c.l.b16 %v839
  %v1135 = vunpack.c.l.b16 %v840
  %v1136 = vunpack.c.l.b16 %v841
  %v1137 = vunpack.c.l.b16 %v842
  %v1138 = vunpack.c.l.b16 %v843
  %v1139 = vunpack.c.l.b16 %v844
  %v1140 = vunpack.c.l.b16 %v845
  %v1141 = vunpack.c.l.b16 %v846
  %v1142 = vunpack.c.l.b16 %v847
  %v1143 = vunpack.c.l.b16 %v848
  %v1144 = vunpack.c.l.b16 %v849
  %v1145 = vunpack.c.l.b16 %v850
  %v1146 = vunpack.c.l.b16 %v851
  %v1147 = vunpack.c.l.b16 %v852
  %v1148 = vunpack.c.l.b16 %v853
  %v1149 = vunpack.c.l.b16 %v854
  %v1150 = vunpack.c.l.b16 %v855
  %v1151 = vunpack.c.l.b16 %v856
  %v1152 = vunpack.c.l.b16 %v857
  %v1153 = vunpack.c.l.b16 %v858
  %v1154 = vunpack.c.l.b16 %v859
  %v1155 = vunpack.c.l.b16 %v860
  %v1156 = vunpack.c.l.b16 %v861
  %v1157 = vunpack.c.l.b16 %v862
  %v1158 = vunpack.c.l.b16 %v863
  %v1159 = vunpack.c.l.b16 %v864
  %v1160 = vunpack.c.l.b16 %v865
  %v1161 = vunpack.c.l.b16 %v866
  %v1162 = vunpack.c.l.b16 %v867
  %v1163 = vunpack.c.l.b16 %v868
  %v1164 = vunpack.c.l.b16 %v869
  %v1165 = vunpack.c.l.b16 %v870
  %v1166 = vunpack.c.l.b16 %v871
  %v1167 = vunpack.c.l.b16 %v872
  %v1168 = vunpack.c.l.b16 %v873
  %v1169 = vunpack.c.l.b16 %v874
  %v1170 = vunpack.c.l.b16 %v875
  %v1171 = vunpack.c.l.b16 %v876
  %v1172 = vunpack.c.l.b16 %v877
  %v1173 = vunpack.c.l.b16 %v878
  %v1174 = vunpack.c.l.b16 %v879
  %v1175 = vunpack.c.l.b16 %v880
  %v1176 = vunpack.c.l.b16 %v881
  %v1177 = vunpack.c.l.b16 %v882
  %v1178 = vunpack.c.l.b16 %v883
  %v1179 = vunpack.c.l.b16 %v884
  %v1180 = vunpack.c.l.b16 %v885
  %v1181 = vunpack.c.l.b16 %v886
  %v1182 = vunpack.c.l.b16 %v887
  %v1183 = vunpack.c.l.b16 %v888
  %v1184 = vunpack.c.l.b16 %v889
  %v1185 = vunpack.c.l.b16 %v890
  %v1186 = vunpack.c.l.b16 %v891
  %v1187 = vunpack.c.l.b16 %v892
  %v1188 = vunpack.c.l.b16 %v893
  %v1189 = vunpack.c.l.b16 %v894
  %v1190 = vunpack.c.l.b16 %v895
  %v1191 = vunpack.c.l.b16 %v896
  %v1192 = vunpack.c.l.b16 %v897
  %v1193 = vunpack.c.l.b16 %v898
  %v1194 = vunpack.c.l.b16 %v899
  %v1195 = vunpack.c.l.b16 %v900
  %v1196 = vunpack.c.l.b16 %v901
  %v1197 = vunpack.c.l.b16 %v902
  %v1198 = vunpack.c.l.b16 %v903
  %v1199 = vunpack.c.l.b16 %v904
  %v1200 = vunpack.c.l.b16 %v905
  %v1201 = vunpack.c.l.b16 %v906
  %v1202 = vunpack.c.l.b16 %v907
  %v1203 = vunpack.c.l.b16 %v908
  %v1204 = vunpack.c.l.b16 %v909
  %v1205 = vunpack.c.l.b16 %v910
  %v1206 = vunpack.c.l.b16 %v911
  %v1207 = vunpack.c.l.b16 %v912
  %v1208 = vpack.c.b16 %v1065, %v1064
  %v1209 = vpack.c.b16 %v1067, %v1066
  %v1210 = vpack.c.b16 %v1069, %v1068
  %v1211 = vpack.c.b16 %v1071, %v1070
  %v1212 = vpack.c.b16 %v1073, %v1072
  %v1213 = vpack.c.b16 %v1075, %v1074
  %v1214 = vpack.c.b16 %v1077, %v1076
  %v1215 = vpack.c.b16 %v1079, %v1078
  %v1216 = vpack.c.b16 %v1081, %v1080
  %v1217 = vpack.c.b16 %v1083, %v1082
  %v1218 = vpack.c.b16 %v1085, %v1084
  %v1219 = vpack.c.b16 %v1087, %v1086
  %v1220 = vpack.c.b16 %v1089, %v1088
  %v1221 = vpack.c.b16 %v1091, %v1090
  %v1222 = vpack.c.b16 %v1093, %v1092
  %v1223 = vpack.c.b16 %v1095, %v1094
  %v1224 = vpack.c.b16 %v1097, %v1096
  %v1225 = vpack.c.b16 %v1099, %v1098
  %v1226 = vpack.c.b16 %v1101, %v1100
  %v1227 = vpack.c.b16 %v1103, %v1102
  %v1228 = vpack.c.b16 %v1105, %v1104
  %v1229 = vpack.c.b16 %v1107, %v1106
  %v1230 = vpack.c.b16 %v1109, %v1108
  %v1231 = vpack.c.b16 %v1111, %v1110
  %v1232 = vpack.c.b16 %v1113, %v1112
  %v1233 = vpack.c.b16 %v1115, %v1114
  %v1234 = vpack.c.b16 %v1117, %v1116
  %v1235 = vpack.c.b16 %v1119, %v1118
  %v1236 = vpack.c.b16 %v1121, %v1120
  %v1237 = vpack.c.b16 %v1123, %v1122
  %v1238 = vpack.c.b16 %v1125, %v1124
  %v1239 = vpack.c.b16 %v1127, %v1126
  %v1240 = vpack.c.b16 %v1129, %v1128
  %v1241 = vpack.c.b16 %v1131, %v1130
  %v1242 = vpack.c.b16 %v1133, %v1132
  %v1243 = vpack.c.b16 %v1135, %v1134
  %v1244 = vpack.c.b16 %v1137, %v1136
  %v1245 = vpack.c.b16 %v1139, %v1138
  %v1246 = vpack.c.b16 %v1141, %v1140
  %v1247 = vpack.c.b16 %v1143, %v1142
  %v1248 = vpack.c.b16 %v1145, %v1144
  %v1249 = vpack.c.b16 %v1147, %v1146
  %v1250 = vpack.c.b16 %v1149, %v1148
  %v1251 = vpack.c.b16 %v1151, %v1150
  %v1252 = vpack.c.b16 %v1153, %v1152
  %v1253 = vpack.c.b16 %v1155, %v1154
  %v1254 = vpack.c.b16 %v1157, %v1156
  %v1255 = vpack.c.b16 %v1159, %v1158
  %v1256 = vpack.c.b16 %v1161, %v1160
  %v1257 = vpack.c.b16 %v1163, %v1162
  %v1258 = vpack.c.b16 %v1165, %v1164
  %v1259 = vpack.c.b16 %v1167, %v1166
  %v1260 = vpack.c.b16 %v1169, %v1168
  %v1261 = vpack.c.b16 %v1171, %v1170
  %v1262 = vpack.c.b16 %v1173, %v1172
  %v1263 = vpack.c.b16 %v1175, %v1174
  %v1264 = vpack.c.b16 %v1177, %v1176
  %v1265 = vpack.c.b16 %v1179, %v1178
  %v1266 = vpack.c.b16 %v1181, %v1180
  %v1267 = vpack.c.b16 %v1183, %v1182
  %v1268 = vpack.c.b16 %v1185, %v1184
  %v1269 = vpack.c.b16 %v1187, %v1186
  %v1270 = vpack.c.b16 %v1189, %v1188
  %v1271 = vpack.c.b16 %v1191, %v1190
  %v1272 = vpack.c.b16 %v1193, %v1192
  %v1273 = vpack.c.b16 %v1195, %v1194
  %v1274 = vpack.c.b16 %v1197, %v1196
  %v1275 = vpack.c.b16 %v1199, %v1198
  %v1276 = vpack.c.b16 %v1201, %v1200
  %v1277 = vpack.c.b16 %v1203, %v1202
  %v1278 = vpack.c.b16 %v1205, %v1204
  %v1279 = vpack.c.b16 %v1207, %v1206
  %1352 = vmatprep.subr.bf16.mxu0 0
  %1353 = vmatpush1.bf16.msra.mxu0 %v1215
  %1354 = vmatprep.subr.bf16.mxu0 0
  %1355 = vmatpush1.bf16.msra.mxu0 %v1214
  %1356 = vmatprep.subr.bf16.mxu0 0
  %1357 = vmatpush1.bf16.msra.mxu0 %v1213
  %1358 = vmatprep.subr.bf16.mxu0 0
  %1359 = vmatpush1.bf16.msra.mxu0 %v1212
  %1360 = vmatprep.subr.bf16.mxu0 0
  %1361 = vmatpush1.bf16.msra.mxu0 %v1211
  %1362 = vmatprep.subr.bf16.mxu0 0
  %1363 = vmatpush1.bf16.msra.mxu0 %v1210
  %1364 = vmatprep.subr.bf16.mxu0 0
  %1365 = vmatpush1.bf16.msra.mxu0 %v1209
  %1366 = vmatprep.subr.bf16.mxu0 0
  %1367 = vmatpush1.bf16.msra.mxu0 %v1208
  %1368 = vmatprep.subr.bf16.mxu0 0
  %1369 = vmatpush2.bf16.msra.mxu0 %v1223
  %1370 = vmatprep.subr.bf16.mxu0 0
  %1371 = vmatpush2.bf16.msra.mxu0 %v1222
  %1372 = vmatprep.subr.bf16.mxu0 0
  %1373 = vmatpush2.bf16.msra.mxu0 %v1221
  %1374 = vmatprep.subr.bf16.mxu0 0
  %1375 = vmatpush2.bf16.msra.mxu0 %v1220
  %1376 = vmatprep.subr.bf16.mxu0 0
  %1377 = vmatpush2.bf16.msra.mxu0 %v1219
  %1378 = vmatprep.subr.bf16.mxu0 0
  %1379 = vmatpush2.bf16.msra.mxu0 %v1218
  %1380 = vmatprep.subr.bf16.mxu0 0
  %1381 = vmatpush2.bf16.msra.mxu0 %v1217
  %1382 = vmatprep.subr.bf16.mxu0 0
  %1383 = vmatpush2.bf16.msra.mxu0 %v1216
  %1384 = vmatprep.mubr.bf16.mxu0 %v662
  %1385 = vmatmul.mubr.bf16.gmra.mxu0 %v661
  %v1386 = vpop.f32.mrf.mxu0
  %v1387 = vadd.f32 %v918, %v1386
  %v1388 = vpop.f32.mrf.mxu0
  %v1389 = vpop.f32.mrf.mxu0
  %v1390 = vadd.f32 %v918, %v1389
  %v1391 = vpop.f32.mrf.mxu0
  %1392 = vmatprep.mubr.bf16.mxu0 %v668
  %1393 = vmatmul.mubr.bf16.gmra.mxu0 %v667
  %v1394 = vpop.f32.mrf.mxu0
  %v1395 = vadd.f32 %v918, %v1394
  %v1396 = vpop.f32.mrf.mxu0
  %v1397 = vpop.f32.mrf.mxu0
  %v1398 = vadd.f32 %v918, %v1397
  %v1399 = vpop.f32.mrf.mxu0
  %1400 = vmatprep.mubr.bf16.mxu0 %v674
  %1401 = vmatmul.mubr.bf16.gmra.mxu0 %v673
  %v1402 = vpop.f32.mrf.mxu0
  %v1403 = vadd.f32 %v918, %v1402
  %v1404 = vpop.f32.mrf.mxu0
  %v1405 = vpop.f32.mrf.mxu0
  %v1406 = vadd.f32 %v918, %v1405
  %v1407 = vpop.f32.mrf.mxu0
  %1408 = vmatprep.mubr.bf16.mxu0 %v680
  %1409 = vmatmul.mubr.bf16.gmra.mxu0 %v679
  %v1410 = vpop.f32.mrf.mxu0
  %v1411 = vadd.f32 %v918, %v1410
  %v1412 = vpop.f32.mrf.mxu0
  %v1413 = vpop.f32.mrf.mxu0
  %v1414 = vadd.f32 %v918, %v1413
  %v1415 = vpop.f32.mrf.mxu0
  %1416 = vmatprep.mubr.bf16.mxu0 %v689
  %1417 = vmatmul.mubr.bf16.gmra.mxu0 %v688
  %v1418 = vpop.f32.mrf.mxu0
  %v1419 = vadd.f32 %v918, %v1418
  %v1420 = vpop.f32.mrf.mxu0
  %v1421 = vpop.f32.mrf.mxu0
  %v1422 = vadd.f32 %v918, %v1421
  %v1423 = vpop.f32.mrf.mxu0
  %1424 = vmatprep.mubr.bf16.mxu0 %v695
  %1425 = vmatmul.mubr.bf16.gmra.mxu0 %v694
  %v1426 = vpop.f32.mrf.mxu0
  %v1427 = vadd.f32 %v918, %v1426
  %v1428 = vpop.f32.mrf.mxu0
  %v1429 = vpop.f32.mrf.mxu0
  %v1430 = vadd.f32 %v918, %v1429
  %v1431 = vpop.f32.mrf.mxu0
  %1432 = vmatprep.mubr.bf16.mxu0 %v701
  %1433 = vmatmul.mubr.bf16.gmra.mxu0 %v700
  %v1434 = vpop.f32.mrf.mxu0
  %v1435 = vadd.f32 %v918, %v1434
  %v1436 = vpop.f32.mrf.mxu0
  %v1437 = vpop.f32.mrf.mxu0
  %v1438 = vadd.f32 %v918, %v1437
  %v1439 = vpop.f32.mrf.mxu0
  %1440 = vmatprep.mubr.bf16.mxu0 %v707
  %1441 = vmatmul.mubr.bf16.gmra.mxu0 %v706
  %v1442 = vpop.f32.mrf.mxu0
  %v1443 = vadd.f32 %v918, %v1442
  %v1444 = vpop.f32.mrf.mxu0
  %v1445 = vpop.f32.mrf.mxu0
  %v1446 = vadd.f32 %v918, %v1445
  %v1447 = vpop.f32.mrf.mxu0
  %1448 = vmatprep.mubr.bf16.mxu0 %v716
  %1449 = vmatmul.mubr.bf16.gmra.mxu0 %v715
  %v1450 = vpop.f32.mrf.mxu0
  %v1451 = vadd.f32 %v918, %v1450
  %v1452 = vpop.f32.mrf.mxu0
  %v1453 = vpop.f32.mrf.mxu0
  %v1454 = vadd.f32 %v918, %v1453
  %v1455 = vpop.f32.mrf.mxu0
  %1456 = vmatprep.mubr.bf16.mxu0 %v722
  %1457 = vmatmul.mubr.bf16.gmra.mxu0 %v721
  %v1458 = vpop.f32.mrf.mxu0
  %v1459 = vadd.f32 %v918, %v1458
  %v1460 = vpop.f32.mrf.mxu0
  %v1461 = vpop.f32.mrf.mxu0
  %v1462 = vadd.f32 %v918, %v1461
  %v1463 = vpop.f32.mrf.mxu0
  %1464 = vmatprep.mubr.bf16.mxu0 %v728
  %1465 = vmatmul.mubr.bf16.gmra.mxu0 %v727
  %v1466 = vpop.f32.mrf.mxu0
  %v1467 = vadd.f32 %v918, %v1466
  %v1468 = vpop.f32.mrf.mxu0
  %v1469 = vpop.f32.mrf.mxu0
  %v1470 = vadd.f32 %v918, %v1469
  %v1471 = vpop.f32.mrf.mxu0
  %1472 = vmatprep.mubr.bf16.mxu0 %v734
  %1473 = vmatmul.mubr.bf16.gmra.mxu0 %v733
  %v1474 = vpop.f32.mrf.mxu0
  %v1475 = vadd.f32 %v918, %v1474
  %v1476 = vpop.f32.mrf.mxu0
  %v1477 = vpop.f32.mrf.mxu0
  %v1478 = vadd.f32 %v918, %v1477
  %v1479 = vpop.f32.mrf.mxu0
  %1480 = vmatprep.mubr.bf16.mxu0 %v743
  %1481 = vmatmul.mubr.bf16.gmra.mxu0 %v742
  %v1482 = vpop.f32.mrf.mxu0
  %v1483 = vadd.f32 %v918, %v1482
  %v1484 = vpop.f32.mrf.mxu0
  %v1485 = vpop.f32.mrf.mxu0
  %v1486 = vadd.f32 %v918, %v1485
  %v1487 = vpop.f32.mrf.mxu0
  %1488 = vmatprep.mubr.bf16.mxu0 %v749
  %1489 = vmatmul.mubr.bf16.gmra.mxu0 %v748
  %v1490 = vpop.f32.mrf.mxu0
  %v1491 = vadd.f32 %v918, %v1490
  %v1492 = vpop.f32.mrf.mxu0
  %v1493 = vpop.f32.mrf.mxu0
  %v1494 = vadd.f32 %v918, %v1493
  %v1495 = vpop.f32.mrf.mxu0
  %1496 = vmatprep.mubr.bf16.mxu0 %v755
  %1497 = vmatmul.mubr.bf16.gmra.mxu0 %v754
  %v1498 = vpop.f32.mrf.mxu0
  %v1499 = vadd.f32 %v918, %v1498
  %v1500 = vpop.f32.mrf.mxu0
  %v1501 = vpop.f32.mrf.mxu0
  %v1502 = vadd.f32 %v918, %v1501
  %v1503 = vpop.f32.mrf.mxu0
  %1504 = vmatprep.mubr.bf16.mxu0 %v761
  %1505 = vmatmul.mubr.bf16.gmra.mxu0 %v760
  %v1506 = vpop.f32.mrf.mxu0
  %v1507 = vadd.f32 %v918, %v1506
  %v1508 = vpop.f32.mrf.mxu0
  %v1509 = vpop.f32.mrf.mxu0
  %v1510 = vadd.f32 %v918, %v1509
  %v1511 = vpop.f32.mrf.mxu0
  %1512 = vdwg.mxu0
  %1513 = vmatprep.subr.bf16.mxu0 0
  %1514 = vmatpush1.bf16.msra.mxu0 %v1231
  %1515 = vmatprep.subr.bf16.mxu0 0
  %1516 = vmatpush1.bf16.msra.mxu0 %v1230
  %1517 = vmatprep.subr.bf16.mxu0 0
  %1518 = vmatpush1.bf16.msra.mxu0 %v1229
  %1519 = vmatprep.subr.bf16.mxu0 0
  %1520 = vmatpush1.bf16.msra.mxu0 %v1228
  %1521 = vmatprep.subr.bf16.mxu0 0
  %1522 = vmatpush1.bf16.msra.mxu0 %v1227
  %1523 = vmatprep.subr.bf16.mxu0 0
  %1524 = vmatpush1.bf16.msra.mxu0 %v1226
  %1525 = vmatprep.subr.bf16.mxu0 0
  %1526 = vmatpush1.bf16.msra.mxu0 %v1225
  %1527 = vmatprep.subr.bf16.mxu0 0
  %1528 = vmatpush1.bf16.msra.mxu0 %v1224
  %1529 = vmatprep.subr.bf16.mxu0 0
  %1530 = vmatpush2.bf16.msra.mxu0 %v1239
  %1531 = vmatprep.subr.bf16.mxu0 0
  %1532 = vmatpush2.bf16.msra.mxu0 %v1238
  %1533 = vmatprep.subr.bf16.mxu0 0
  %1534 = vmatpush2.bf16.msra.mxu0 %v1237
  %1535 = vmatprep.subr.bf16.mxu0 0
  %1536 = vmatpush2.bf16.msra.mxu0 %v1236
  %1537 = vmatprep.subr.bf16.mxu0 0
  %1538 = vmatpush2.bf16.msra.mxu0 %v1235
  %1539 = vmatprep.subr.bf16.mxu0 0
  %1540 = vmatpush2.bf16.msra.mxu0 %v1234
  %1541 = vmatprep.subr.bf16.mxu0 0
  %1542 = vmatpush2.bf16.msra.mxu0 %v1233
  %1543 = vmatprep.subr.bf16.mxu0 0
  %1544 = vmatpush2.bf16.msra.mxu0 %v1232
  %1545 = vmatprep.mubr.bf16.mxu0 %v664
  %1546 = vmatmul.mubr.bf16.gmra.mxu0 %v663
  %v1547 = vpop.f32.mrf.mxu0
  %v1548 = vadd.f32 %v1387, %v1547
  %v1549 = vpop.f32.mrf.mxu0
  %v1550 = vpop.f32.mrf.mxu0
  %v1551 = vadd.f32 %v1390, %v1550
  %v1552 = vpop.f32.mrf.mxu0
  %1553 = vmatprep.mubr.bf16.mxu0 %v670
  %1554 = vmatmul.mubr.bf16.gmra.mxu0 %v669
  %v1555 = vpop.f32.mrf.mxu0
  %v1556 = vadd.f32 %v1395, %v1555
  %v1557 = vpop.f32.mrf.mxu0
  %v1558 = vpop.f32.mrf.mxu0
  %v1559 = vadd.f32 %v1398, %v1558
  %v1560 = vpop.f32.mrf.mxu0
  %1561 = vmatprep.mubr.bf16.mxu0 %v676
  %1562 = vmatmul.mubr.bf16.gmra.mxu0 %v675
  %v1563 = vpop.f32.mrf.mxu0
  %v1564 = vadd.f32 %v1403, %v1563
  %v1565 = vpop.f32.mrf.mxu0
  %v1566 = vpop.f32.mrf.mxu0
  %v1567 = vadd.f32 %v1406, %v1566
  %v1568 = vpop.f32.mrf.mxu0
  %1569 = vmatprep.mubr.bf16.mxu0 %v682
  %1570 = vmatmul.mubr.bf16.gmra.mxu0 %v681
  %v1571 = vpop.f32.mrf.mxu0
  %v1572 = vadd.f32 %v1411, %v1571
  %v1573 = vpop.f32.mrf.mxu0
  %v1574 = vpop.f32.mrf.mxu0
  %v1575 = vadd.f32 %v1414, %v1574
  %v1576 = vpop.f32.mrf.mxu0
  %1577 = vmatprep.mubr.bf16.mxu0 %v691
  %1578 = vmatmul.mubr.bf16.gmra.mxu0 %v690
  %v1579 = vpop.f32.mrf.mxu0
  %v1580 = vadd.f32 %v1419, %v1579
  %v1581 = vpop.f32.mrf.mxu0
  %v1582 = vpop.f32.mrf.mxu0
  %v1583 = vadd.f32 %v1422, %v1582
  %v1584 = vpop.f32.mrf.mxu0
  %1585 = vmatprep.mubr.bf16.mxu0 %v697
  %1586 = vmatmul.mubr.bf16.gmra.mxu0 %v696
  %v1587 = vpop.f32.mrf.mxu0
  %v1588 = vadd.f32 %v1427, %v1587
  %v1589 = vpop.f32.mrf.mxu0
  %v1590 = vpop.f32.mrf.mxu0
  %v1591 = vadd.f32 %v1430, %v1590
  %v1592 = vpop.f32.mrf.mxu0
  %1593 = vmatprep.mubr.bf16.mxu0 %v703
  %1594 = vmatmul.mubr.bf16.gmra.mxu0 %v702
  %v1595 = vpop.f32.mrf.mxu0
  %v1596 = vadd.f32 %v1435, %v1595
  %v1597 = vpop.f32.mrf.mxu0
  %v1598 = vpop.f32.mrf.mxu0
  %v1599 = vadd.f32 %v1438, %v1598
  %v1600 = vpop.f32.mrf.mxu0
  %1601 = vmatprep.mubr.bf16.mxu0 %v709
  %1602 = vmatmul.mubr.bf16.gmra.mxu0 %v708
  %v1603 = vpop.f32.mrf.mxu0
  %v1604 = vadd.f32 %v1443, %v1603
  %v1605 = vpop.f32.mrf.mxu0
  %v1606 = vpop.f32.mrf.mxu0
  %v1607 = vadd.f32 %v1446, %v1606
  %v1608 = vpop.f32.mrf.mxu0
  %1609 = vmatprep.mubr.bf16.mxu0 %v718
  %1610 = vmatmul.mubr.bf16.gmra.mxu0 %v717
  %v1611 = vpop.f32.mrf.mxu0
  %v1612 = vadd.f32 %v1451, %v1611
  %v1613 = vpop.f32.mrf.mxu0
  %v1614 = vpop.f32.mrf.mxu0
  %v1615 = vadd.f32 %v1454, %v1614
  %v1616 = vpop.f32.mrf.mxu0
  %1617 = vmatprep.mubr.bf16.mxu0 %v724
  %1618 = vmatmul.mubr.bf16.gmra.mxu0 %v723
  %v1619 = vpop.f32.mrf.mxu0
  %v1620 = vadd.f32 %v1459, %v1619
  %v1621 = vpop.f32.mrf.mxu0
  %v1622 = vpop.f32.mrf.mxu0
  %v1623 = vadd.f32 %v1462, %v1622
  %v1624 = vpop.f32.mrf.mxu0
  %1625 = vmatprep.mubr.bf16.mxu0 %v730
  %1626 = vmatmul.mubr.bf16.gmra.mxu0 %v729
  %v1627 = vpop.f32.mrf.mxu0
  %v1628 = vadd.f32 %v1467, %v1627
  %v1629 = vpop.f32.mrf.mxu0
  %v1630 = vpop.f32.mrf.mxu0
  %v1631 = vadd.f32 %v1470, %v1630
  %v1632 = vpop.f32.mrf.mxu0
  %1633 = vmatprep.mubr.bf16.mxu0 %v736
  %1634 = vmatmul.mubr.bf16.gmra.mxu0 %v735
  %v1635 = vpop.f32.mrf.mxu0
  %v1636 = vadd.f32 %v1475, %v1635
  %v1637 = vpop.f32.mrf.mxu0
  %v1638 = vpop.f32.mrf.mxu0
  %v1639 = vadd.f32 %v1478, %v1638
  %v1640 = vpop.f32.mrf.mxu0
  %1641 = vmatprep.mubr.bf16.mxu0 %v745
  %1642 = vmatmul.mubr.bf16.gmra.mxu0 %v744
  %v1643 = vpop.f32.mrf.mxu0
  %v1644 = vadd.f32 %v1483, %v1643
  %v1645 = vpop.f32.mrf.mxu0
  %v1646 = vpop.f32.mrf.mxu0
  %v1647 = vadd.f32 %v1486, %v1646
  %v1648 = vpop.f32.mrf.mxu0
  %1649 = vmatprep.mubr.bf16.mxu0 %v751
  %1650 = vmatmul.mubr.bf16.gmra.mxu0 %v750
  %v1651 = vpop.f32.mrf.mxu0
  %v1652 = vadd.f32 %v1491, %v1651
  %v1653 = vpop.f32.mrf.mxu0
  %v1654 = vpop.f32.mrf.mxu0
  %v1655 = vadd.f32 %v1494, %v1654
  %v1656 = vpop.f32.mrf.mxu0
  %1657 = vmatprep.mubr.bf16.mxu0 %v757
  %1658 = vmatmul.mubr.bf16.gmra.mxu0 %v756
  %v1659 = vpop.f32.mrf.mxu0
  %v1660 = vadd.f32 %v1499, %v1659
  %v1661 = vpop.f32.mrf.mxu0
  %v1662 = vpop.f32.mrf.mxu0
  %v1663 = vadd.f32 %v1502, %v1662
  %v1664 = vpop.f32.mrf.mxu0
  %1665 = vmatprep.mubr.bf16.mxu0 %v763
  %1666 = vmatmul.mubr.bf16.gmra.mxu0 %v762
  %v1667 = vpop.f32.mrf.mxu0
  %v1668 = vadd.f32 %v1507, %v1667
  %v1669 = vpop.f32.mrf.mxu0
  %v1670 = vpop.f32.mrf.mxu0
  %v1671 = vadd.f32 %v1510, %v1670
  %v1672 = vpop.f32.mrf.mxu0
  %1673 = vdwg.mxu0
  %1674 = vmatprep.subr.bf16.mxu0 0
  %1675 = vmatpush1.bf16.msra.mxu0 %v1247
  %1676 = vmatprep.subr.bf16.mxu0 0
  %1677 = vmatpush1.bf16.msra.mxu0 %v1246
  %1678 = vmatprep.subr.bf16.mxu0 0
  %1679 = vmatpush1.bf16.msra.mxu0 %v1245
  %1680 = vmatprep.subr.bf16.mxu0 0
  %1681 = vmatpush1.bf16.msra.mxu0 %v1244
  %1682 = vmatprep.subr.bf16.mxu0 0
  %1683 = vmatpush1.bf16.msra.mxu0 %v1243
  %1684 = vmatprep.subr.bf16.mxu0 0
  %1685 = vmatpush1.bf16.msra.mxu0 %v1242
  %1686 = vmatprep.subr.bf16.mxu0 0
  %1687 = vmatpush1.bf16.msra.mxu0 %v1241
  %1688 = vmatprep.subr.bf16.mxu0 0
  %1689 = vmatpush1.bf16.msra.mxu0 %v1240
  %1690 = vmatprep.subr.bf16.mxu0 0
  %1691 = vmatpush2.bf16.msra.mxu0 %v1255
  %1692 = vmatprep.subr.bf16.mxu0 0
  %1693 = vmatpush2.bf16.msra.mxu0 %v1254
  %1694 = vmatprep.subr.bf16.mxu0 0
  %1695 = vmatpush2.bf16.msra.mxu0 %v1253
  %1696 = vmatprep.subr.bf16.mxu0 0
  %1697 = vmatpush2.bf16.msra.mxu0 %v1252
  %1698 = vmatprep.subr.bf16.mxu0 0
  %1699 = vmatpush2.bf16.msra.mxu0 %v1251
  %1700 = vmatprep.subr.bf16.mxu0 0
  %1701 = vmatpush2.bf16.msra.mxu0 %v1250
  %1702 = vmatprep.subr.bf16.mxu0 0
  %1703 = vmatpush2.bf16.msra.mxu0 %v1249
  %1704 = vmatprep.subr.bf16.mxu0 0
  %1705 = vmatpush2.bf16.msra.mxu0 %v1248
  %1706 = vmatprep.mubr.bf16.mxu0 %v666
  %1707 = vmatmul.mubr.bf16.gmra.mxu0 %v665
  %v1708 = vpop.f32.mrf.mxu0
  %v1709 = vadd.f32 %v1548, %v1708
  %v1710 = vpop.f32.mrf.mxu0
  %v1711 = vpop.f32.mrf.mxu0
  %v1712 = vadd.f32 %v1551, %v1711
  %v1713 = vpop.f32.mrf.mxu0
  %1714 = vmatprep.mubr.bf16.mxu0 %v672
  %1715 = vmatmul.mubr.bf16.gmra.mxu0 %v671
  %v1716 = vpop.f32.mrf.mxu0
  %v1717 = vadd.f32 %v1556, %v1716
  %v1718 = vpop.f32.mrf.mxu0
  %v1719 = vpop.f32.mrf.mxu0
  %v1720 = vadd.f32 %v1559, %v1719
  %v1721 = vpop.f32.mrf.mxu0
  %1722 = vmatprep.mubr.bf16.mxu0 %v678
  %1723 = vmatmul.mubr.bf16.gmra.mxu0 %v677
  %v1724 = vpop.f32.mrf.mxu0
  %v1725 = vadd.f32 %v1564, %v1724
  %v1726 = vpop.f32.mrf.mxu0
  %v1727 = vpop.f32.mrf.mxu0
  %v1728 = vadd.f32 %v1567, %v1727
  %v1729 = vpop.f32.mrf.mxu0
  %1730 = vmatprep.mubr.bf16.mxu0 %v684
  %1731 = vmatmul.mubr.bf16.gmra.mxu0 %v683
  %v1732 = vpop.f32.mrf.mxu0
  %v1733 = vadd.f32 %v1572, %v1732
  %v1734 = vpop.f32.mrf.mxu0
  %v1735 = vpop.f32.mrf.mxu0
  %v1736 = vadd.f32 %v1575, %v1735
  %v1737 = vpop.f32.mrf.mxu0
  %1738 = vmatprep.mubr.bf16.mxu0 %v693
  %1739 = vmatmul.mubr.bf16.gmra.mxu0 %v692
  %v1740 = vpop.f32.mrf.mxu0
  %v1741 = vadd.f32 %v1580, %v1740
  %v1742 = vpop.f32.mrf.mxu0
  %v1743 = vpop.f32.mrf.mxu0
  %v1744 = vadd.f32 %v1583, %v1743
  %v1745 = vpop.f32.mrf.mxu0
  %1746 = vmatprep.mubr.bf16.mxu0 %v699
  %1747 = vmatmul.mubr.bf16.gmra.mxu0 %v698
  %v1748 = vpop.f32.mrf.mxu0
  %v1749 = vadd.f32 %v1588, %v1748
  %v1750 = vpop.f32.mrf.mxu0
  %v1751 = vpop.f32.mrf.mxu0
  %v1752 = vadd.f32 %v1591, %v1751
  %v1753 = vpop.f32.mrf.mxu0
  %1754 = vmatprep.mubr.bf16.mxu0 %v705
  %1755 = vmatmul.mubr.bf16.gmra.mxu0 %v704
  %v1756 = vpop.f32.mrf.mxu0
  %v1757 = vadd.f32 %v1596, %v1756
  %v1758 = vpop.f32.mrf.mxu0
  %v1759 = vpop.f32.mrf.mxu0
  %v1760 = vadd.f32 %v1599, %v1759
  %v1761 = vpop.f32.mrf.mxu0
  %1762 = vmatprep.mubr.bf16.mxu0 %v711
  %1763 = vmatmul.mubr.bf16.gmra.mxu0 %v710
  %v1764 = vpop.f32.mrf.mxu0
  %v1765 = vadd.f32 %v1604, %v1764
  %v1766 = vpop.f32.mrf.mxu0
  %v1767 = vpop.f32.mrf.mxu0
  %v1768 = vadd.f32 %v1607, %v1767
  %v1769 = vpop.f32.mrf.mxu0
  %1770 = vmatprep.mubr.bf16.mxu0 %v720
  %1771 = vmatmul.mubr.bf16.gmra.mxu0 %v719
  %v1772 = vpop.f32.mrf.mxu0
  %v1773 = vadd.f32 %v1612, %v1772
  %v1774 = vpop.f32.mrf.mxu0
  %v1775 = vpop.f32.mrf.mxu0
  %v1776 = vadd.f32 %v1615, %v1775
  %v1777 = vpop.f32.mrf.mxu0
  %1778 = vmatprep.mubr.bf16.mxu0 %v726
  %1779 = vmatmul.mubr.bf16.gmra.mxu0 %v725
  %v1780 = vpop.f32.mrf.mxu0
  %v1781 = vadd.f32 %v1620, %v1780
  %v1782 = vpop.f32.mrf.mxu0
  %v1783 = vpop.f32.mrf.mxu0
  %v1784 = vadd.f32 %v1623, %v1783
  %v1785 = vpop.f32.mrf.mxu0
  %1786 = vmatprep.mubr.bf16.mxu0 %v732
  %1787 = vmatmul.mubr.bf16.gmra.mxu0 %v731
  %v1788 = vpop.f32.mrf.mxu0
  %v1789 = vadd.f32 %v1628, %v1788
  %v1790 = vpop.f32.mrf.mxu0
  %v1791 = vpop.f32.mrf.mxu0
  %v1792 = vadd.f32 %v1631, %v1791
  %v1793 = vpop.f32.mrf.mxu0
  %1794 = vmatprep.mubr.bf16.mxu0 %v738
  %1795 = vmatmul.mubr.bf16.gmra.mxu0 %v737
  %v1796 = vpop.f32.mrf.mxu0
  %v1797 = vadd.f32 %v1636, %v1796
  %v1798 = vpop.f32.mrf.mxu0
  %v1799 = vpop.f32.mrf.mxu0
  %v1800 = vadd.f32 %v1639, %v1799
  %v1801 = vpop.f32.mrf.mxu0
  %1802 = vmatprep.mubr.bf16.mxu0 %v747
  %1803 = vmatmul.mubr.bf16.gmra.mxu0 %v746
  %v1804 = vpop.f32.mrf.mxu0
  %v1805 = vadd.f32 %v1644, %v1804
  %v1806 = vpop.f32.mrf.mxu0
  %v1807 = vpop.f32.mrf.mxu0
  %v1808 = vadd.f32 %v1647, %v1807
  %v1809 = vpop.f32.mrf.mxu0
  %1810 = vmatprep.mubr.bf16.mxu0 %v753
  %1811 = vmatmul.mubr.bf16.gmra.mxu0 %v752
  %v1812 = vpop.f32.mrf.mxu0
  %v1813 = vadd.f32 %v1652, %v1812
  %v1814 = vpop.f32.mrf.mxu0
  %v1815 = vpop.f32.mrf.mxu0
  %v1816 = vadd.f32 %v1655, %v1815
  %v1817 = vpop.f32.mrf.mxu0
  %1818 = vmatprep.mubr.bf16.mxu0 %v759
  %1819 = vmatmul.mubr.bf16.gmra.mxu0 %v758
  %v1820 = vpop.f32.mrf.mxu0
  %v1821 = vadd.f32 %v1660, %v1820
  %v1822 = vpop.f32.mrf.mxu0
  %v1823 = vpop.f32.mrf.mxu0
  %v1824 = vadd.f32 %v1663, %v1823
  %v1825 = vpop.f32.mrf.mxu0
  %1826 = vmatprep.mubr.bf16.mxu0 %v765
  %1827 = vmatmul.mubr.bf16.gmra.mxu0 %v764
  %v1828 = vpop.f32.mrf.mxu0
  %v1829 = vadd.f32 %v1668, %v1828
  %v1830 = vpop.f32.mrf.mxu0
  %v1831 = vpop.f32.mrf.mxu0
  %v1832 = vadd.f32 %v1671, %v1831
  %v1833 = vpop.f32.mrf.mxu0
  %1834 = vdwg.mxu0
  %1835 = vmatprep.subr.bf16.mxu0 0
  %1836 = vmatpush1.bf16.msra.mxu0 %v1263
  %1837 = vmatprep.subr.bf16.mxu0 0
  %1838 = vmatpush1.bf16.msra.mxu0 %v1262
  %1839 = vmatprep.subr.bf16.mxu0 0
  %1840 = vmatpush1.bf16.msra.mxu0 %v1261
  %1841 = vmatprep.subr.bf16.mxu0 0
  %1842 = vmatpush1.bf16.msra.mxu0 %v1260
  %1843 = vmatprep.subr.bf16.mxu0 0
  %1844 = vmatpush1.bf16.msra.mxu0 %v1259
  %1845 = vmatprep.subr.bf16.mxu0 0
  %1846 = vmatpush1.bf16.msra.mxu0 %v1258
  %1847 = vmatprep.subr.bf16.mxu0 0
  %1848 = vmatpush1.bf16.msra.mxu0 %v1257
  %1849 = vmatprep.subr.bf16.mxu0 0
  %1850 = vmatpush1.bf16.msra.mxu0 %v1256
  %1851 = vmatprep.subr.bf16.mxu0 0
  %1852 = vmatpush2.bf16.msra.mxu0 %v1271
  %1853 = vmatprep.subr.bf16.mxu0 0
  %1854 = vmatpush2.bf16.msra.mxu0 %v1270
  %1855 = vmatprep.subr.bf16.mxu0 0
  %1856 = vmatpush2.bf16.msra.mxu0 %v1269
  %1857 = vmatprep.subr.bf16.mxu0 0
  %1858 = vmatpush2.bf16.msra.mxu0 %v1268
  %1859 = vmatprep.subr.bf16.mxu0 0
  %1860 = vmatpush2.bf16.msra.mxu0 %v1267
  %1861 = vmatprep.subr.bf16.mxu0 0
  %1862 = vmatpush2.bf16.msra.mxu0 %v1266
  %1863 = vmatprep.subr.bf16.mxu0 0
  %1864 = vmatpush2.bf16.msra.mxu0 %v1265
  %1865 = vmatprep.subr.bf16.mxu0 0
  %1866 = vmatpush2.bf16.msra.mxu0 %v1264
  %1867 = vmatprep.mubr.bf16.mxu0 %v668
  %1868 = vmatmul.mubr.bf16.gmra.mxu0 %v667
  %v1869 = vpop.f32.mrf.mxu0
  %v1870 = vadd.f32 %v1709, %v1869
  %v1871 = vpop.f32.mrf.mxu0
  %v1872 = vpop.f32.mrf.mxu0
  %v1873 = vadd.f32 %v1712, %v1872
  %v1874 = vpop.f32.mrf.mxu0
  %1875 = vmatprep.mubr.bf16.mxu0 %v674
  %1876 = vmatmul.mubr.bf16.gmra.mxu0 %v673
  %v1877 = vpop.f32.mrf.mxu0
  %v1878 = vadd.f32 %v1717, %v1877
  %v1879 = vpop.f32.mrf.mxu0
  %v1880 = vpop.f32.mrf.mxu0
  %v1881 = vadd.f32 %v1720, %v1880
  %v1882 = vpop.f32.mrf.mxu0
  %1883 = vmatprep.mubr.bf16.mxu0 %v680
  %1884 = vmatmul.mubr.bf16.gmra.mxu0 %v679
  %v1885 = vpop.f32.mrf.mxu0
  %v1886 = vadd.f32 %v1725, %v1885
  %v1887 = vpop.f32.mrf.mxu0
  %v1888 = vpop.f32.mrf.mxu0
  %v1889 = vadd.f32 %v1728, %v1888
  %v1890 = vpop.f32.mrf.mxu0
  %1891 = vmatprep.mubr.bf16.mxu0 %v686
  %1892 = vmatmul.mubr.bf16.gmra.mxu0 %v685
  %v1893 = vpop.f32.mrf.mxu0
  %v1894 = vadd.f32 %v1733, %v1893
  %v1895 = vpop.f32.mrf.mxu0
  %v1896 = vpop.f32.mrf.mxu0
  %v1897 = vadd.f32 %v1736, %v1896
  %v1898 = vpop.f32.mrf.mxu0
  %1899 = vmatprep.mubr.bf16.mxu0 %v695
  %1900 = vmatmul.mubr.bf16.gmra.mxu0 %v694
  %v1901 = vpop.f32.mrf.mxu0
  %v1902 = vadd.f32 %v1741, %v1901
  %v1903 = vpop.f32.mrf.mxu0
  %v1904 = vpop.f32.mrf.mxu0
  %v1905 = vadd.f32 %v1744, %v1904
  %v1906 = vpop.f32.mrf.mxu0
  %1907 = vmatprep.mubr.bf16.mxu0 %v701
  %1908 = vmatmul.mubr.bf16.gmra.mxu0 %v700
  %v1909 = vpop.f32.mrf.mxu0
  %v1910 = vadd.f32 %v1749, %v1909
  %v1911 = vpop.f32.mrf.mxu0
  %v1912 = vpop.f32.mrf.mxu0
  %v1913 = vadd.f32 %v1752, %v1912
  %v1914 = vpop.f32.mrf.mxu0
  %1915 = vmatprep.mubr.bf16.mxu0 %v707
  %1916 = vmatmul.mubr.bf16.gmra.mxu0 %v706
  %v1917 = vpop.f32.mrf.mxu0
  %v1918 = vadd.f32 %v1757, %v1917
  %v1919 = vpop.f32.mrf.mxu0
  %v1920 = vpop.f32.mrf.mxu0
  %v1921 = vadd.f32 %v1760, %v1920
  %v1922 = vpop.f32.mrf.mxu0
  %1923 = vmatprep.mubr.bf16.mxu0 %v713
  %1924 = vmatmul.mubr.bf16.gmra.mxu0 %v712
  %v1925 = vpop.f32.mrf.mxu0
  %v1926 = vadd.f32 %v1765, %v1925
  %v1927 = vpop.f32.mrf.mxu0
  %v1928 = vpop.f32.mrf.mxu0
  %v1929 = vadd.f32 %v1768, %v1928
  %v1930 = vpop.f32.mrf.mxu0
  %1931 = vmatprep.mubr.bf16.mxu0 %v722
  %1932 = vmatmul.mubr.bf16.gmra.mxu0 %v721
  %v1933 = vpop.f32.mrf.mxu0
  %v1934 = vadd.f32 %v1773, %v1933
  %v1935 = vpop.f32.mrf.mxu0
  %v1936 = vpop.f32.mrf.mxu0
  %v1937 = vadd.f32 %v1776, %v1936
  %v1938 = vpop.f32.mrf.mxu0
  %1939 = vmatprep.mubr.bf16.mxu0 %v728
  %1940 = vmatmul.mubr.bf16.gmra.mxu0 %v727
  %v1941 = vpop.f32.mrf.mxu0
  %v1942 = vadd.f32 %v1781, %v1941
  %v1943 = vpop.f32.mrf.mxu0
  %v1944 = vpop.f32.mrf.mxu0
  %v1945 = vadd.f32 %v1784, %v1944
  %v1946 = vpop.f32.mrf.mxu0
  %1947 = vmatprep.mubr.bf16.mxu0 %v734
  %1948 = vmatmul.mubr.bf16.gmra.mxu0 %v733
  %v1949 = vpop.f32.mrf.mxu0
  %v1950 = vadd.f32 %v1789, %v1949
  %v1951 = vpop.f32.mrf.mxu0
  %v1952 = vpop.f32.mrf.mxu0
  %v1953 = vadd.f32 %v1792, %v1952
  %v1954 = vpop.f32.mrf.mxu0
  %1955 = vmatprep.mubr.bf16.mxu0 %v740
  %1956 = vmatmul.mubr.bf16.gmra.mxu0 %v739
  %v1957 = vpop.f32.mrf.mxu0
  %v1958 = vadd.f32 %v1797, %v1957
  %v1959 = vpop.f32.mrf.mxu0
  %v1960 = vpop.f32.mrf.mxu0
  %v1961 = vadd.f32 %v1800, %v1960
  %v1962 = vpop.f32.mrf.mxu0
  %1963 = vmatprep.mubr.bf16.mxu0 %v749
  %1964 = vmatmul.mubr.bf16.gmra.mxu0 %v748
  %v1965 = vpop.f32.mrf.mxu0
  %v1966 = vadd.f32 %v1805, %v1965
  %v1967 = vpop.f32.mrf.mxu0
  %v1968 = vpop.f32.mrf.mxu0
  %v1969 = vadd.f32 %v1808, %v1968
  %v1970 = vpop.f32.mrf.mxu0
  %1971 = vmatprep.mubr.bf16.mxu0 %v755
  %1972 = vmatmul.mubr.bf16.gmra.mxu0 %v754
  %v1973 = vpop.f32.mrf.mxu0
  %v1974 = vadd.f32 %v1813, %v1973
  %v1975 = vpop.f32.mrf.mxu0
  %v1976 = vpop.f32.mrf.mxu0
  %v1977 = vadd.f32 %v1816, %v1976
  %v1978 = vpop.f32.mrf.mxu0
  %1979 = vmatprep.mubr.bf16.mxu0 %v761
  %1980 = vmatmul.mubr.bf16.gmra.mxu0 %v760
  %v1981 = vpop.f32.mrf.mxu0
  %v1982 = vadd.f32 %v1821, %v1981
  %v1983 = vpop.f32.mrf.mxu0
  %v1984 = vpop.f32.mrf.mxu0
  %v1985 = vadd.f32 %v1824, %v1984
  %v1986 = vpop.f32.mrf.mxu0
  %1987 = vmatprep.mubr.bf16.mxu0 %v767
  %1988 = vmatmul.mubr.bf16.gmra.mxu0 %v766
  %v1989 = vpop.f32.mrf.mxu0
  %v1990 = vadd.f32 %v1829, %v1989
  %v1991 = vpop.f32.mrf.mxu0
  %v1992 = vpop.f32.mrf.mxu0
  %v1993 = vadd.f32 %v1832, %v1992
  %v1994 = vpop.f32.mrf.mxu0
  %1995 = vdwg.mxu0
  %1996 = vmatprep.subr.bf16.mxu0 0
  %1997 = vmatpush1.bf16.msra.mxu0 %v1279
  %1998 = vmatprep.subr.bf16.mxu0 0
  %1999 = vmatpush1.bf16.msra.mxu0 %v1278
  %2000 = vmatprep.subr.bf16.mxu0 0
  %2001 = vmatpush1.bf16.msra.mxu0 %v1277
  %2002 = vmatprep.subr.bf16.mxu0 0
  %2003 = vmatpush1.bf16.msra.mxu0 %v1276
  %2004 = vmatprep.subr.bf16.mxu0 0
  %2005 = vmatpush1.bf16.msra.mxu0 %v1275
  %2006 = vmatprep.subr.bf16.mxu0 0
  %2007 = vmatpush1.bf16.msra.mxu0 %v1274
  %2008 = vmatprep.subr.bf16.mxu0 0
  %2009 = vmatpush1.bf16.msra.mxu0 %v1273
  %2010 = vmatprep.subr.bf16.mxu0 0
  %2011 = vmatpush1.bf16.msra.mxu0 %v1272
  %2012 = vmatprep.subr.bf16.mxu0 0
  %2013 = vmatpush2.bf16.msra.mxu0 0
  %2014 = vmatprep.subr.bf16.mxu0 0
  %2015 = vmatpush2.bf16.msra.mxu0 0
  %2016 = vmatprep.subr.bf16.mxu0 0
  %2017 = vmatpush2.bf16.msra.mxu0 0
  %2018 = vmatprep.subr.bf16.mxu0 0
  %2019 = vmatpush2.bf16.msra.mxu0 0
  %2020 = vmatprep.subr.bf16.mxu0 0
  %2021 = vmatpush2.bf16.msra.mxu0 0
  %2022 = vmatprep.subr.bf16.mxu0 0
  %2023 = vmatpush2.bf16.msra.mxu0 0
  %2024 = vmatprep.subr.bf16.mxu0 0
  %2025 = vmatpush2.bf16.msra.mxu0 0
  %2026 = vmatprep.subr.bf16.mxu0 0
  %2027 = vmatpush2.bf16.msra.mxu0 0
  %2028 = vmatprep.mubr.bf16.mxu0 0
  %2029 = vmatmul.mubr.bf16.gmra.mxu0 %v669
  %v2030 = vpop.f32.mrf.mxu0
  %v2031 = vadd.f32 %v1870, %v2030
  %v2032 = vpop.f32.mrf.mxu0
  %v2033 = vpop.f32.mrf.mxu0
  %v2034 = vadd.f32 %v1873, %v2033
  %v2035 = vpop.f32.mrf.mxu0
  %2036 = vmatprep.mubr.bf16.mxu0 0
  %2037 = vmatmul.mubr.bf16.gmra.mxu0 %v675
  %v2038 = vpop.f32.mrf.mxu0
  %v2039 = vadd.f32 %v1878, %v2038
  %v2040 = vpop.f32.mrf.mxu0
  %v2041 = vpop.f32.mrf.mxu0
  %v2042 = vadd.f32 %v1881, %v2041
  %v2043 = vpop.f32.mrf.mxu0
  %2044 = vmatprep.mubr.bf16.mxu0 0
  %2045 = vmatmul.mubr.bf16.gmra.mxu0 %v681
  %v2046 = vpop.f32.mrf.mxu0
  %v2047 = vadd.f32 %v1886, %v2046
  %v2048 = vpop.f32.mrf.mxu0
  %v2049 = vpop.f32.mrf.mxu0
  %v2050 = vadd.f32 %v1889, %v2049
  %v2051 = vpop.f32.mrf.mxu0
  %2052 = vmatprep.mubr.bf16.mxu0 0
  %2053 = vmatmul.mubr.bf16.gmra.mxu0 %v687
  %v2054 = vpop.f32.mrf.mxu0
  %v2055 = vadd.f32 %v1894, %v2054
  %v2056 = vpop.f32.mrf.mxu0
  %v2057 = vpop.f32.mrf.mxu0
  %v2058 = vadd.f32 %v1897, %v2057
  %v2059 = vpop.f32.mrf.mxu0
  %2060 = vmatprep.mubr.bf16.mxu0 0
  %2061 = vmatmul.mubr.bf16.gmra.mxu0 %v696
  %v2062 = vpop.f32.mrf.mxu0
  %v2063 = vadd.f32 %v1902, %v2062
  %v2064 = vpop.f32.mrf.mxu0
  %v2065 = vpop.f32.mrf.mxu0
  %v2066 = vadd.f32 %v1905, %v2065
  %v2067 = vpop.f32.mrf.mxu0
  %2068 = vmatprep.mubr.bf16.mxu0 0
  %2069 = vmatmul.mubr.bf16.gmra.mxu0 %v702
  %v2070 = vpop.f32.mrf.mxu0
  %v2071 = vadd.f32 %v1910, %v2070
  %v2072 = vpop.f32.mrf.mxu0
  %v2073 = vpop.f32.mrf.mxu0
  %v2074 = vadd.f32 %v1913, %v2073
  %v2075 = vpop.f32.mrf.mxu0
  %2076 = vmatprep.mubr.bf16.mxu0 0
  %2077 = vmatmul.mubr.bf16.gmra.mxu0 %v708
  %v2078 = vpop.f32.mrf.mxu0
  %v2079 = vadd.f32 %v1918, %v2078
  %v2080 = vpop.f32.mrf.mxu0
  %v2081 = vpop.f32.mrf.mxu0
  %v2082 = vadd.f32 %v1921, %v2081
  %v2083 = vpop.f32.mrf.mxu0
  %2084 = vmatprep.mubr.bf16.mxu0 0
  %2085 = vmatmul.mubr.bf16.gmra.mxu0 %v714
  %v2086 = vpop.f32.mrf.mxu0
  %v2087 = vadd.f32 %v1926, %v2086
  %v2088 = vpop.f32.mrf.mxu0
  %v2089 = vpop.f32.mrf.mxu0
  %v2090 = vadd.f32 %v1929, %v2089
  %v2091 = vpop.f32.mrf.mxu0
  %2092 = vmatprep.mubr.bf16.mxu0 0
  %2093 = vmatmul.mubr.bf16.gmra.mxu0 %v723
  %v2094 = vpop.f32.mrf.mxu0
  %v2095 = vadd.f32 %v1934, %v2094
  %v2096 = vpop.f32.mrf.mxu0
  %v2097 = vpop.f32.mrf.mxu0
  %v2098 = vadd.f32 %v1937, %v2097
  %v2099 = vpop.f32.mrf.mxu0
  %2100 = vmatprep.mubr.bf16.mxu0 0
  %2101 = vmatmul.mubr.bf16.gmra.mxu0 %v729
  %v2102 = vpop.f32.mrf.mxu0
  %v2103 = vadd.f32 %v1942, %v2102
  %v2104 = vpop.f32.mrf.mxu0
  %v2105 = vpop.f32.mrf.mxu0
  %v2106 = vadd.f32 %v1945, %v2105
  %v2107 = vpop.f32.mrf.mxu0
  %2108 = vmatprep.mubr.bf16.mxu0 0
  %2109 = vmatmul.mubr.bf16.gmra.mxu0 %v735
  %v2110 = vpop.f32.mrf.mxu0
  %v2111 = vadd.f32 %v1950, %v2110
  %v2112 = vpop.f32.mrf.mxu0
  %v2113 = vpop.f32.mrf.mxu0
  %v2114 = vadd.f32 %v1953, %v2113
  %v2115 = vpop.f32.mrf.mxu0
  %2116 = vmatprep.mubr.bf16.mxu0 0
  %2117 = vmatmul.mubr.bf16.gmra.mxu0 %v741
  %v2118 = vpop.f32.mrf.mxu0
  %v2119 = vadd.f32 %v1958, %v2118
  %v2120 = vpop.f32.mrf.mxu0
  %v2121 = vpop.f32.mrf.mxu0
  %v2122 = vadd.f32 %v1961, %v2121
  %v2123 = vpop.f32.mrf.mxu0
  %2124 = vmatprep.mubr.bf16.mxu0 0
  %2125 = vmatmul.mubr.bf16.gmra.mxu0 %v750
  %v2126 = vpop.f32.mrf.mxu0
  %v2127 = vadd.f32 %v1966, %v2126
  %v2128 = vpop.f32.mrf.mxu0
  %v2129 = vpop.f32.mrf.mxu0
  %v2130 = vadd.f32 %v1969, %v2129
  %v2131 = vpop.f32.mrf.mxu0
  %2132 = vmatprep.mubr.bf16.mxu0 0
  %2133 = vmatmul.mubr.bf16.gmra.mxu0 %v756
  %v2134 = vpop.f32.mrf.mxu0
  %v2135 = vadd.f32 %v1974, %v2134
  %v2136 = vpop.f32.mrf.mxu0
  %v2137 = vpop.f32.mrf.mxu0
  %v2138 = vadd.f32 %v1977, %v2137
  %v2139 = vpop.f32.mrf.mxu0
  %2140 = vmatprep.mubr.bf16.mxu0 0
  %2141 = vmatmul.mubr.bf16.gmra.mxu0 %v762
  %v2142 = vpop.f32.mrf.mxu0
  %v2143 = vadd.f32 %v1982, %v2142
  %v2144 = vpop.f32.mrf.mxu0
  %v2145 = vpop.f32.mrf.mxu0
  %v2146 = vadd.f32 %v1985, %v2145
  %v2147 = vpop.f32.mrf.mxu0
  %2148 = vmatprep.mubr.bf16.mxu0 0
  %2149 = vmatmul.mubr.bf16.gmra.mxu0 %v768
  %v2150 = vpop.f32.mrf.mxu0
  %v2151 = vadd.f32 %v1990, %v2150
  %v2152 = vpop.f32.mrf.mxu0
  %v2153 = vpop.f32.mrf.mxu0
  %v2154 = vadd.f32 %v1993, %v2153
  %v2155 = vpop.f32.mrf.mxu0
  %2156 = vdwg.mxu0
  %v2157 = vadd.f32 %v21, %v2031
  %v2158 = vadd.f32 %v22, %v2034
  %v2159 = vadd.f32 %v23, %v2039
  %v2160 = vadd.f32 %v24, %v2042
  %v2161 = vadd.f32 %v25, %v2047
  %v2162 = vadd.f32 %v26, %v2050
  %v2163 = vadd.f32 %v27, %v2055
  %v2164 = vadd.f32 %v28, %v2058
  %v2165 = vadd.f32 %v29, %v2063
  %v2166 = vadd.f32 %v30, %v2066
  %v2167 = vadd.f32 %v31, %v2071
  %v2168 = vadd.f32 %v32, %v2074
  %v2169 = vadd.f32 %v33, %v2079
  %v2170 = vadd.f32 %v34, %v2082
  %v2171 = vadd.f32 %v35, %v2087
  %v2172 = vadd.f32 %v36, %v2090
  %v2173 = vadd.f32 %v37, %v2095
  %v2174 = vadd.f32 %v38, %v2098
  %v2175 = vadd.f32 %v39, %v2103
  %v2176 = vadd.f32 %v40, %v2106
  %v2177 = vadd.f32 %v41, %v2111
  %v2178 = vadd.f32 %v42, %v2114
  %v2179 = vadd.f32 %v43, %v2119
  %v2180 = vadd.f32 %v44, %v2122
  %v2181 = vadd.f32 %v45, %v2127
  %v2182 = vadd.f32 %v46, %v2130
  %v2183 = vadd.f32 %v47, %v2135
  %v2184 = vadd.f32 %v48, %v2138
  %v2185 = vadd.f32 %v49, %v2143
  %v2186 = vadd.f32 %v50, %v2146
  %v2187 = vadd.f32 %v51, %v2151
  %v2188 = vadd.f32 %v52, %v2154
  %2189 = vst [vmem:[%s5] sm:$0xff] %v2157
  %2190 = vst [vmem:[%s5 + $0x8] sm:$0xff] %v2158
  %2191 = vst [vmem:[%s5 + $0x10] sm:$0xff] %v2159
  %2192 = vst [vmem:[%s5 + $0x18] sm:$0xff] %v2160
  %2193 = vst [vmem:[%s5 + $0x20] sm:$0xff] %v2161
  %2194 = vst [vmem:[%s5 + $0x28] sm:$0xff] %v2162
  %2195 = vst [vmem:[%s5 + $0x30] sm:$0xff] %v2163
  %2196 = vst [vmem:[%s5 + $0x38] sm:$0xff] %v2164
  %2197 = vst [vmem:[%s5 + $0x40] sm:$0xff] %v2165
  %2198 = vst [vmem:[%s5 + $0x48] sm:$0xff] %v2166
  %2199 = vst [vmem:[%s5 + $0x50] sm:$0xff] %v2167
  %2200 = vst [vmem:[%s5 + $0x58] sm:$0xff] %v2168
  %2201 = vst [vmem:[%s5 + $0x60] sm:$0xff] %v2169
  %2202 = vst [vmem:[%s5 + $0x68] sm:$0xff] %v2170
  %2203 = vst [vmem:[%s5 + $0x70] sm:$0xff] %v2171
  %2204 = vst [vmem:[%s5 + $0x78] sm:$0xff] %v2172
  %2205 = vst [vmem:[%s5 + $0x80] sm:$0xff] %v2173
  %2206 = vst [vmem:[%s5 + $0x88] sm:$0xff] %v2174
  %2207 = vst [vmem:[%s5 + $0x90] sm:$0xff] %v2175
  %2208 = vst [vmem:[%s5 + $0x98] sm:$0xff] %v2176
  %2209 = vst [vmem:[%s5 + $0xa0] sm:$0xff] %v2177
  %2210 = vst [vmem:[%s5 + $0xa8] sm:$0xff] %v2178
  %2211 = vst [vmem:[%s5 + $0xb0] sm:$0xff] %v2179
  %2212 = vst [vmem:[%s5 + $0xb8] sm:$0xff] %v2180
  %2213 = vst [vmem:[%s5 + $0xc0] sm:$0xff] %v2181
  %2214 = vst [vmem:[%s5 + $0xc8] sm:$0xff] %v2182
  %2215 = vst [vmem:[%s5 + $0xd0] sm:$0xff] %v2183
  %2216 = vst [vmem:[%s5 + $0xd8] sm:$0xff] %v2184
  %2217 = vst [vmem:[%s5 + $0xe0] sm:$0xff] %v2185
  %2218 = vst [vmem:[%s5 + $0xe8] sm:$0xff] %v2186
  %2219 = vst [vmem:[%s5 + $0xf0] sm:$0xff] %v2187
  %2220 = vst [vmem:[%s5 + $0xf8] sm:$0xff] %v2188
  // Predicated region
  $region22: #{dense_block_forward.5} parent=0 // pred_check
    _
  $region23: #{dense_block_forward.5} parent=0 // pred_check_branch
    %2222 = sbr.rel (0) target = $region25
  $region24: #{dense_block_forward.5} parent=0 // pred_region
    _
  $region25: #{dense_block_forward.5} parent=0 // pred_fallthru
    _
  // Predicated region
  $region26: #{dense_block_forward.5} parent=0 // pred_check
    _
  $region27: #{dense_block_forward.5} parent=0 // pred_check_branch
    %2224 = sbr.rel (0) target = $region29
  $region28: #{dense_block_forward.5} parent=0 // pred_region
    _
  $region29: #{dense_block_forward.5} parent=0 // pred_fallthru
    _

</llo_original>
